<compile_context>
chip_gen: v7x
topology: tpu7x:2x2x1
jax: 0.10.0
libtpu: 0.0.40
codegen_flags: <defaults>
</compile_context>

<pallas_src>
import functools

import jax
import jax.numpy as jnp
from jax.experimental import pallas as pl
from jax.experimental.pallas import tpu as pltpu

LEAKY_SLOPE = 0.01      # nn.LeakyReLU() default
BN_EPS = 1e-5           # nn.BatchNorm2d default
VMEM_LIMIT = 32 * 1024 * 1024   # explicit scoped-VMEM limit (v5e default is 16 MiB)


def _round_up(x, m):
    return (x + m - 1) // m * m


def _cdiv(a, b):
    return -(-a // b)


def _largest_divisor_leq(n, cap):
    d = max(1, min(n, cap))
    while n % d != 0:
        d -= 1
    return d


def _pick_row_tile(m, unit, cap):
    """Largest row tile (multiple of `unit`, <= ~cap) preferring an even block count so the
    two v7x TensorCores split the parallel grid evenly (avoid nM = 5-style odd counts)."""
    max_units = max(1, min(max(1, cap // unit), _cdiv(m, unit)))
    tm0 = max_units * unit
    nm0 = _cdiv(m, tm0)
    if nm0 <= 1 or nm0 % 2 == 0:
        return tm0, nm0
    for u in range(max_units - 1, max(0, max_units // 2) - 1, -1):
        tm = u * unit
        nm = _cdiv(m, tm)
        if nm % 2 == 0:
            return tm, nm
    return tm0, nm0


def _apply_epilogue(acc, scale, shift, act):
    y = acc * scale + shift
    if act == "relu":
        y = jnp.maximum(y, 0.0)
    elif act == "leaky_relu":
        y = jnp.where(y >= 0.0, y, y * LEAKY_SLOPE)
    return y


# ----------------------------------------------------------------------------
# Kernel 1: implicit-GEMM 3x3 conv (stride 1, pad 1) with fused BN/bias + act.
# Rows of the GEMM are flattened *padded* spatial positions, so every tap is a
# constant row offset.  Full-Cin / full-Cout blocks => weights are DMAed once
# per layer; the 9 tap matmuls are summed locally and stored once (bf16).
# ----------------------------------------------------------------------------
def _conv3x3_kernel(xa_ref, xb_ref, w_ref, scale_ref, shift_ref, o_ref, xcat_ref,
                    *, tm, opad, wp, act):
    # Stage current row block + forward halo contiguously in VMEM (bf16) so every tap
    # is a static, contiguous row window of a single buffer.
    xcat_ref[0:tm, :] = xa_ref[...]
    xcat_ref[tm:tm + opad, :] = xb_ref[...]

    acc = None
    for dy in range(3):
        for dx in range(3):
            off = dy * wp + dx                      # static tap offset (rows)
            d = jnp.dot(xcat_ref[off:off + tm, :], w_ref[dy * 3 + dx],
                        preferred_element_type=jnp.float32)
            acc = d if acc is None else acc + d     # local f32 accumulation, single store below

    y = _apply_epilogue(acc, scale_ref[...], shift_ref[...], act)
    o_ref[...] = y.astype(o_ref.dtype)


@functools.lru_cache(maxsize=None)
def _get_conv3x3_call(nM, nN, tm, tn, tkc, opad, wp, coutp, act):
    kernel = functools.partial(_conv3x3_kernel, tm=tm, opad=opad, wp=wp, act=act)
    ratio = tm // opad
    return pl.pallas_call(
        kernel,
        out_shape=jax.ShapeDtypeStruct((nM * tm, coutp), jnp.bfloat16),
        grid_spec=pltpu.PrefetchScalarGridSpec(
            num_scalar_prefetch=0,
            grid=(nM, nN),
            in_specs=[
                pl.BlockSpec((tm, tkc), lambda i, j: (i, 0)),                  # row block
                pl.BlockSpec((opad, tkc), lambda i, j: ((i + 1) * ratio, 0)),  # forward halo
                pl.BlockSpec((9, tkc, tn), lambda i, j: (0, 0, j)),            # 9 tap weights (resident)
                pl.BlockSpec((1, tn), lambda i, j: (0, j)),                    # scale
                pl.BlockSpec((1, tn), lambda i, j: (0, j)),                    # shift
            ],
            out_specs=pl.BlockSpec((tm, tn), lambda i, j: (i, j)),
            scratch_shapes=[pltpu.VMEM((tm + opad, tkc), jnp.bfloat16)],
        ),
        compiler_params=pltpu.CompilerParams(
            dimension_semantics=("parallel", "parallel"),
            vmem_limit_bytes=VMEM_LIMIT),
    )


def conv3x3_fused(x, w_oihw, scale, shift, act):
    """x: NHWC (f32 or bf16), w: (Cout, Cin, 3, 3).  Returns NHWC bf16."""
    N, H, W, Cin = x.shape
    Cout = w_oihw.shape[0]
    Hp, Wp = H + 2, W + 2
    L = Hp * Wp
    M = N * L                                     # outputs over the padded grid (edges discarded)

    o_max = 2 * Wp + 2                            # largest tap row-offset
    opad = _round_up(o_max, 8)                    # halo rounded to sublanes only
    row_cap = 512 if Cin <= 512 else 320          # keep the 1024-ch concat layers under VMEM budget
    tm, nM = _pick_row_tile(M, opad, row_cap)
    Mp = nM * tm

    tkc = Cin                                     # full reduction in one block (nK == 1)
    coutp = _round_up(Cout, 128)
    tn = min(512, coutp)
    coutp = _round_up(coutp, tn)
    nN = coutp // tn                              # == 1 for every layer of this model

    # One padded copy of the input, flattened to rows over the padded spatial grid (bf16).
    xf = jnp.pad(x.astype(jnp.bfloat16), ((0, 0), (1, 1), (1, 1), (0, 0))).reshape(M, Cin)
    xf = jnp.pad(xf, ((0, Mp + opad - M), (0, 0)))

    wmat = jnp.transpose(w_oihw, (2, 3, 1, 0)).reshape(9, Cin, Cout)
    wmat = jnp.pad(wmat, ((0, 0), (0, 0), (0, coutp - Cout))).astype(jnp.bfloat16)
    sp = jnp.pad(scale.astype(jnp.float32), (0, coutp - Cout)).reshape(1, coutp)
    bp = jnp.pad(shift.astype(jnp.float32), (0, coutp - Cout)).reshape(1, coutp)

    out = _get_conv3x3_call(nM, nN, tm, tn, tkc, opad, Wp, coutp, act)(xf, xf, wmat, sp, bp)
    # Valid outputs live in the top-left HxW corner of the padded grid; padded channels / border
    # rows hold garbage and are sliced away here (layout is not carried between layers).
    return out[:M].reshape(N, Hp, Wp, coutp)[:, :H, :W, :Cout]


# ----------------------------------------------------------------------------
# Kernel 2: fused matmul (1x1 convs and the im2col'ed stem): bf16 operands,
# f32 accumulation, per-output-channel affine + activation epilogue, bf16 out.
# ----------------------------------------------------------------------------
def _matmul_kernel(x_ref, w_ref, scale_ref, shift_ref, o_ref, *, act):
    acc = jnp.dot(x_ref[...], w_ref[...], preferred_element_type=jnp.float32)
    y = _apply_epilogue(acc, scale_ref[...], shift_ref[...], act)
    o_ref[...] = y.astype(o_ref.dtype)


@functools.lru_cache(maxsize=None)
def _get_matmul_call(nM, nN, tm, tn, K, act):
    kernel = functools.partial(_matmul_kernel, act=act)
    return pl.pallas_call(
        kernel,
        out_shape=jax.ShapeDtypeStruct((nM * tm, nN * tn), jnp.bfloat16),
        grid_spec=pltpu.PrefetchScalarGridSpec(
            num_scalar_prefetch=0,
            grid=(nM, nN),
            in_specs=[
                pl.BlockSpec((tm, K), lambda i, j: (i, 0)),    # full-K row block (nK == 1)
                pl.BlockSpec((K, tn), lambda i, j: (0, j)),    # resident weight block
                pl.BlockSpec((1, tn), lambda i, j: (0, j)),
                pl.BlockSpec((1, tn), lambda i, j: (0, j)),
            ],
            out_specs=pl.BlockSpec((tm, tn), lambda i, j: (i, j)),
        ),
        compiler_params=pltpu.CompilerParams(
            dimension_semantics=("parallel", "parallel"),
            vmem_limit_bytes=VMEM_LIMIT),
    )


def fused_matmul(x, w, scale, shift, act):
    M, K = x.shape
    N = w.shape[1]
    tm, nM = _pick_row_tile(M, 8, 512)
    Mp = nM * tm
    np0 = _round_up(N, 128)
    tn = min(512, np0)
    Np = _round_up(np0, tn)
    nN = Np // tn

    xp = jnp.pad(x.astype(jnp.bfloat16), ((0, Mp - M), (0, 0)))
    wm = jnp.pad(w, ((0, 0), (0, Np - N))).astype(jnp.bfloat16)
    sp = jnp.pad(scale.astype(jnp.float32), (0, Np - N)).reshape(1, Np)
    bp = jnp.pad(shift.astype(jnp.float32), (0, Np - N)).reshape(1, Np)
    out = _get_matmul_call(nM, nN, tm, tn, K, act)(xp, wm, sp, bp)
    return out[:M, :N]


def conv1x1_fused(x, w_oihw, scale, shift, act):
    Nb, H, W, Cin = x.shape
    Cout = w_oihw.shape[0]
    wmat = jnp.transpose(w_oihw, (2, 3, 1, 0)).reshape(Cin, Cout)
    out = fused_matmul(x.reshape(Nb * H * W, Cin), wmat, scale, shift, act)
    return out.reshape(Nb, H, W, Cout)


def conv3x3_im2col(x, w_oihw, scale, shift, act):
    """Stem conv (tiny Cin): XLA im2col to K=9*Cin then the fused matmul kernel."""
    N, H, W, Cin = x.shape
    Cout = w_oihw.shape[0]
    xp = jnp.pad(x.astype(jnp.bfloat16), ((0, 0), (1, 1), (1, 1), (0, 0)))
    cols = [xp[:, dy:dy + H, dx:dx + W, :] for dy in range(3) for dx in range(3)]
    xcol = jnp.concatenate(cols, axis=-1).reshape(N * H * W, 9 * Cin)
    wmat = jnp.transpose(w_oihw, (2, 3, 1, 0)).reshape(9 * Cin, Cout)
    out = fused_matmul(xcol, wmat, scale, shift, act)
    return out.reshape(N, H, W, Cout)


def conv3x3_any(x, w_oihw, scale, shift, act):
    if w_oihw.shape[1] <= 8:        # stem: Cin=3 -> im2col path (K=27 instead of 9 x K=3 matmuls)
        return conv3x3_im2col(x, w_oihw, scale, shift, act)
    return conv3x3_fused(x, w_oihw, scale, shift, act)


# ----------------------------------------------------------------------------
# Kernel 3: MaxPool2d(kernel=2, stride=2), row-tiled over a *free* reshape of
# NHWC to (N*Ho, 2, Wo, 2*C); H parity is a major-dim select, W parity is a
# contiguous lane slice.  Runs in bf16 (half the HBM traffic of the old f32).
# ----------------------------------------------------------------------------
def _maxpool_kernel(x_ref, o_ref, *, c):
    v = x_ref[...]                                # (TR, 2, Wo, 2*C)
    v = jnp.maximum(v[:, 0], v[:, 1])             # (TR, Wo, 2*C)
    o_ref[...] = jnp.maximum(v[:, :, :c], v[:, :, c:])


@functools.lru_cache(maxsize=None)
def _get_maxpool_call(nblocks, tr, wo, c, dtype_name):
    kernel = functools.partial(_maxpool_kernel, c=c)
    dtype = jnp.dtype(dtype_name)
    return pl.pallas_call(
        kernel,
        out_shape=jax.ShapeDtypeStruct((nblocks * tr, wo, c), dtype),
        grid_spec=pltpu.PrefetchScalarGridSpec(
            num_scalar_prefetch=0,
            grid=(nblocks,),
            in_specs=[pl.BlockSpec((tr, 2, wo, 2 * c), lambda i: (i, 0, 0, 0))],
            out_specs=pl.BlockSpec((tr, wo, c), lambda i: (i, 0, 0)),
        ),
        compiler_params=pltpu.CompilerParams(
            dimension_semantics=("parallel",),
            vmem_limit_bytes=VMEM_LIMIT),
    )


def maxpool2x2(x):  # x: NHWC, H and W even
    N, H, W, C = x.shape
    assert H % 2 == 0 and W % 2 == 0, "MaxPool2d(2,2) requires even H and W"
    Ho, Wo = H // 2, W // 2
    R = N * Ho
    row_bytes = 2 * Wo * 2 * C * x.dtype.itemsize
    cap = max(1, min(1024, (4 << 20) // max(1, row_bytes)))
    tr = _largest_divisor_leq(R, cap)
    xr = x.reshape(R, 2, Wo, 2 * C)               # pure reshape, no data movement
    out = _get_maxpool_call(R // tr, tr, Wo, C, jnp.dtype(x.dtype).name)(xr)
    return out.reshape(N, Ho, Wo, C)


# ----------------------------------------------------------------------------
# Deterministic parameter construction (synthetic weights, PyTorch shapes).
# ----------------------------------------------------------------------------
class ParamGen:
    def __init__(self, seed):
        self._key = jax.random.PRNGKey(seed)
        self._i = 0

    def take(self):
        self._i += 1
        return jax.random.fold_in(self._key, self._i)

    def normal(self, shape, stddev=0.05):
        return stddev * jax.random.normal(self.take(), shape, jnp.float32)

    def uniform(self, shape, lo, hi):
        return jax.random.uniform(self.take(), shape, jnp.float32, lo, hi)


def make_conv(pg, cin, cout, k, bias):
    return {"w": pg.normal((cout, cin, k, k)),
            "b": pg.normal((cout,)) if bias else None}


def make_dna(pg, cin, cout, k, num_blocks, bias=False):
    # DeconvNormActivation: [Conv2d -> BatchNorm2d -> LeakyReLU -> (StochasticDropout)] * num_blocks
    blocks = []
    for i in range(num_blocks):
        blk = make_conv(pg, cin if i == 0 else cout, cout, k, bias)
        blk.update(gamma=1.0 + pg.normal((cout,), 0.1),
                   beta=pg.normal((cout,), 0.1),
                   mean=pg.normal((cout,), 0.1),
                   var=pg.uniform((cout,), 0.5, 1.5))
        blocks.append(blk)
    return blocks


VGG16_CFG = [64, 64, "M", 128, 128, "M", 256, 256, 256, "M",
             512, 512, 512, "M", 512, 512, 512, "M"]

# Default (max_channels=512) decoder configuration of VGGUNetDecoder.
DEC_CHANNELS = [512, 512, 512, 512, 512, 256, 256, 128, 64]
DEC_UPSAMPLE = [True, False, False, True, False, True, False, True, True]


def make_encoder(pg, max_channels=512):
    layers, cin = [], 3
    for v in VGG16_CFG:
        if v == "M":
            layers.append(None)                   # None marks a MaxPool2d layer
        else:
            if v > max_channels:
                break
            layers.append(make_conv(pg, cin, v, 3, bias=True))
            cin = v
    return layers


def make_decoder(pg, num_classes=1):
    channels = [DEC_CHANNELS[0]] + DEC_CHANNELS
    channel_blocks, conv_blocks = [], []
    for idx in range(len(channels) - 1):
        cin = channels[idx] + channels[idx + 1] if DEC_UPSAMPLE[idx] else channels[idx]
        nb = 1 if idx == 0 else 3
        channel_blocks.append(make_dna(pg, cin, channels[idx + 1], 3, nb))
        conv_blocks.append(None if idx == 0 else
                           make_dna(pg, channels[idx + 1], channels[idx + 1], 1, 2))
    final_conv = make_dna(pg, channels[-1], num_classes, 1, 1, bias=True)
    return {"channel_blocks": channel_blocks, "conv_blocks": conv_blocks,
            "final_conv": final_conv}


def make_ds_convs(pg, num_classes=1):
    return [make_conv(pg, c, num_classes, 3, bias=True) for c in (512, 512, 512, 256, 128)]


# ----------------------------------------------------------------------------
# Forward passes (mirroring the PyTorch module, eval mode; bf16 activations).
# ----------------------------------------------------------------------------
def dna_forward(x, blocks):
    for blk in blocks:
        inv = blk["gamma"] / jnp.sqrt(blk["var"] + BN_EPS)        # BN eval scale
        shift = blk["beta"] - blk["mean"] * inv                    # BN eval shift
        if blk["b"] is not None:
            shift = shift + blk["b"] * inv                         # fold conv bias through BN
        if blk["w"].shape[-1] == 3:
            x = conv3x3_any(x, blk["w"], inv, shift, act="leaky_relu")
        else:
            x = conv1x1_fused(x, blk["w"], inv, shift, act="leaky_relu")
    return x


def encoder_forward(x, enc_layers):
    feats = []
    for p in enc_layers:
        if p is None:                             # MaxPool2d: stash feature map first
            feats.append(x)
            x = maxpool2x2(x)
        else:
            cout = p["w"].shape[0]
            x = conv3x3_any(x, p["w"], jnp.ones((cout,), jnp.float32), p["b"], act="relu")
    return x, list(reversed(feats))


def upsample2x_nearest(x):                        # F.interpolate(scale_factor=2), mode='nearest'
    N, H, W, C = x.shape
    x = jnp.broadcast_to(x[:, :, None, :, None, :], (N, H, 2, W, 2, C))
    return x.reshape(N, 2 * H, 2 * W, C)


def decoder_forward(x, encoder_tensors, dec):
    eci, ds_feats = 0, []
    for idx, (b1, b2) in enumerate(zip(dec["channel_blocks"], dec["conv_blocks"])):
        if DEC_UPSAMPLE[idx]:
            ds_feats.append(x)
            x = upsample2x_nearest(x)
            x = jnp.concatenate([encoder_tensors[eci], x], axis=-1)   # torch.cat dim=1
            eci += 1
        x = dna_forward(x, b1)
        if b2 is not None:
            x = dna_forward(x, b2)
    return dna_forward(x, dec["final_conv"]), ds_feats


def vggunet_forward(x_nchw, params, deepsupervision=False):
    x = jnp.transpose(x_nchw, (0, 2, 3, 1)).astype(jnp.bfloat16)       # NCHW -> NHWC, bf16
    x, enc_tensors = encoder_forward(x, params["encoder"])
    if not deepsupervision:
        # PyTorch VGGUNet.forward with deepsupervision=False returns the encoder output only.
        return jnp.transpose(x.astype(jnp.float32), (0, 3, 1, 2))
    y, dec_tensors = decoder_forward(x, enc_tensors, params["decoder"])
    outs = []
    for t, cp in zip(dec_tensors, params["ds_convs"]):
        cout = cp["w"].shape[0]
        o = conv3x3_any(t, cp["w"], jnp.ones((cout,), jnp.float32), cp["b"], act="none")
        outs.append(jnp.transpose(o.astype(jnp.float32), (0, 3, 1, 2)))
    return jnp.transpose(y.astype(jnp.float32), (0, 3, 1, 2)), list(reversed(outs))


if __name__ == "__main__":
    k0 = jax.random.PRNGKey(0)

    # --- numeric self-checks of the non-trivial kernels (bf16-aware tolerances) ---
    xt = jax.random.normal(jax.random.fold_in(k0, 101), (1, 8, 8, 16), jnp.float32)
    wt = 0.05 * jax.random.normal(jax.random.fold_in(k0, 102), (32, 16, 3, 3), jnp.float32)
    conv_out = conv3x3_fused(xt, wt, jnp.ones((32,), jnp.float32),
                             jnp.zeros((32,), jnp.float32), act="none").astype(jnp.float32)
    conv_ref = jax.lax.conv_general_dilated(
        xt.astype(jnp.bfloat16).astype(jnp.float32),
        jnp.transpose(wt.astype(jnp.bfloat16).astype(jnp.float32), (2, 3, 1, 0)),
        (1, 1), ((1, 1), (1, 1)), dimension_numbers=("NHWC", "HWIO", "NHWC"))
    err = float(jnp.max(jnp.abs(conv_out - conv_ref)))
    tol = 0.02 * float(jnp.max(jnp.abs(conv_ref))) + 1e-2      # bf16-output quantization
    assert err < tol, (err, tol)

    xs = jax.random.normal(jax.random.fold_in(k0, 103), (1, 8, 8, 3), jnp.float32)
    ws = 0.05 * jax.random.normal(jax.random.fold_in(k0, 104), (8, 3, 3, 3), jnp.float32)
    stem_out = conv3x3_any(xs, ws, jnp.ones((8,), jnp.float32),
                           jnp.zeros((8,), jnp.float32), act="none").astype(jnp.float32)
    stem_ref = jax.lax.conv_general_dilated(
        xs.astype(jnp.bfloat16).astype(jnp.float32),
        jnp.transpose(ws.astype(jnp.bfloat16).astype(jnp.float32), (2, 3, 1, 0)),
        (1, 1), ((1, 1), (1, 1)), dimension_numbers=("NHWC", "HWIO", "NHWC"))
    err = float(jnp.max(jnp.abs(stem_out - stem_ref)))
    tol = 0.02 * float(jnp.max(jnp.abs(stem_ref))) + 1e-2
    assert err < tol, (err, tol)

    pool_out = maxpool2x2(xt)
    pool_ref = jnp.max(xt.reshape(1, 4, 2, 4, 2, 16), axis=(2, 4))
    assert bool(jnp.allclose(pool_out, pool_ref)), "maxpool mismatch"

    # --- full model ------------------------------------------------------------
    pg = ParamGen(0)
    params = {
        "encoder": make_encoder(pg),
        "decoder": make_decoder(pg),
        "ds_convs": make_ds_convs(pg),
    }

    x = jax.random.normal(jax.random.PRNGKey(0), (2, 3, 32, 32), jnp.float32)

    fwd = jax.jit(vggunet_forward, static_argnums=(2,))    # single jit over the whole forward

    # Branch 1: deepsupervision=False (module default) -> encoder features only.
    enc_only = fwd(x, params, False)
    jax.block_until_ready(enc_only)
    assert enc_only.shape == (2, 512, 1, 1), enc_only.shape

    # Branch 2: deepsupervision=True -> full encoder/decoder + deep-supervision heads.
    final, ds_outs = fwd(x, params, True)
    jax.block_until_ready(final)
    jax.block_until_ready(ds_outs)
    assert final.shape == (2, 1, 32, 32), final.shape
    assert [tuple(o.shape) for o in ds_outs] == [(2, 1, 16, 16), (2, 1, 8, 8),
                                                 (2, 1, 4, 4), (2, 1, 2, 2), (2, 1, 1, 1)]

    print("KERNEL_OK")
</pallas_src>

<mosaic_0001>
module attributes {stable_mosaic.version = 11 : i64} {
  func.func @_conv3x3_kernel(%arg0: i32, %arg1: i32, %arg2: memref<120x16xbf16, #tpu.memory_space<vmem>>, %arg3: memref<24x16xbf16, #tpu.memory_space<vmem>>, %arg4: memref<9x16x128xbf16, #tpu.memory_space<vmem>>, %arg5: memref<1x128xf32, #tpu.memory_space<vmem>>, %arg6: memref<1x128xf32, #tpu.memory_space<vmem>>, %arg7: memref<120x128xbf16, #tpu.memory_space<vmem>>, %arg8: memref<144x16xbf16, #tpu.memory_space<vmem>>) attributes {dimension_semantics = [#tpu.dimension_semantics<parallel>, #tpu.dimension_semantics<parallel>], iteration_bounds = array<i64: 1, 1>, scalar_prefetch = 0 : i64, scratch_operands = 1 : i64, tpu.core_type = #tpu.core_type<tc>, window_params = [{transform_indices = @transform_0, window_bounds = array<i64: 120, 16>}, {transform_indices = @transform_1, window_bounds = array<i64: 24, 16>}, {transform_indices = @transform_2, window_bounds = array<i64: 9, 16, 128>}, {transform_indices = @transform_3, window_bounds = array<i64: 1, 128>}, {transform_indices = @transform_4, window_bounds = array<i64: 1, 128>}, {transform_indices = @transform_5, window_bounds = array<i64: 120, 128>}]} {
    %c0 = arith.constant 0 : index
    %c0_0 = arith.constant 0 : index
    %0 = vector.load %arg2[%c0, %c0_0] : memref<120x16xbf16, #tpu.memory_space<vmem>>, vector<120x16xbf16>
    %c0_1 = arith.constant 0 : index
    %c0_2 = arith.constant 0 : index
    %1 = vector.load %arg8[%c0_1, %c0_2] : memref<144x16xbf16, #tpu.memory_space<vmem>>, vector<120x16xbf16>
    tpu.vector_store %arg8[%c0_1, %c0_2], %0 {strides = array<i32>} : memref<144x16xbf16, #tpu.memory_space<vmem>>, vector<120x16xbf16>,
    %c0_3 = arith.constant 0 : index
    %c0_4 = arith.constant 0 : index
    %2 = vector.load %arg3[%c0_3, %c0_4] : memref<24x16xbf16, #tpu.memory_space<vmem>>, vector<24x16xbf16>
    %c120 = arith.constant 120 : index
    %c0_5 = arith.constant 0 : index
    %3 = vector.load %arg8[%c120, %c0_5] : memref<144x16xbf16, #tpu.memory_space<vmem>>, vector<24x16xbf16>
    tpu.vector_store %arg8[%c120, %c0_5], %2 {strides = array<i32>} : memref<144x16xbf16, #tpu.memory_space<vmem>>, vector<24x16xbf16>,
    %c0_6 = arith.constant 0 : index
    %c0_7 = arith.constant 0 : index
    %4 = vector.load %arg8[%c0_6, %c0_7] : memref<144x16xbf16, #tpu.memory_space<vmem>>, vector<120x16xbf16>
    %c0_8 = arith.constant 0 : index
    %c0_9 = arith.constant 0 : index
    %c0_10 = arith.constant 0 : index
    %5 = vector.load %arg4[%c0_8, %c0_9, %c0_10] : memref<9x16x128xbf16, #tpu.memory_space<vmem>>, vector<1x16x128xbf16>
    %6 = vector.shape_cast %5 : vector<1x16x128xbf16> to vector<16x128xbf16>
    %cst = arith.constant dense<0.000000e+00> : vector<120x128xf32>
    %7 = tpu.matmul %4, %6, %cst {dimension_numbers = #tpu.dot_dimension_numbers<[1], [0], [0], [1], [0, 0, 1, 1], [], []>} : vector<120x16xbf16>, vector<16x128xbf16>, vector<120x128xf32> -> vector<120x128xf32>
    %c1 = arith.constant 1 : index
    %c0_11 = arith.constant 0 : index
    %8 = vector.load %arg8[%c1, %c0_11] : memref<144x16xbf16, #tpu.memory_space<vmem>>, vector<120x16xbf16>
    %c1_12 = arith.constant 1 : index
    %c0_13 = arith.constant 0 : index
    %c0_14 = arith.constant 0 : index
    %9 = vector.load %arg4[%c1_12, %c0_13, %c0_14] : memref<9x16x128xbf16, #tpu.memory_space<vmem>>, vector<1x16x128xbf16>
    %10 = vector.shape_cast %9 : vector<1x16x128xbf16> to vector<16x128xbf16>
    %cst_15 = arith.constant dense<0.000000e+00> : vector<120x128xf32>
    %11 = tpu.matmul %8, %10, %cst_15 {dimension_numbers = #tpu.dot_dimension_numbers<[1], [0], [0], [1], [0, 0, 1, 1], [], []>} : vector<120x16xbf16>, vector<16x128xbf16>, vector<120x128xf32> -> vector<120x128xf32>
    %12 = arith.addf %7, %11 : vector<120x128xf32>
    %c2 = arith.constant 2 : index
    %c0_16 = arith.constant 0 : index
    %13 = vector.load %arg8[%c2, %c0_16] : memref<144x16xbf16, #tpu.memory_space<vmem>>, vector<120x16xbf16>
    %c2_17 = arith.constant 2 : index
    %c0_18 = arith.constant 0 : index
    %c0_19 = arith.constant 0 : index
    %14 = vector.load %arg4[%c2_17, %c0_18, %c0_19] : memref<9x16x128xbf16, #tpu.memory_space<vmem>>, vector<1x16x128xbf16>
    %15 = vector.shape_cast %14 : vector<1x16x128xbf16> to vector<16x128xbf16>
    %cst_20 = arith.constant dense<0.000000e+00> : vector<120x128xf32>
    %16 = tpu.matmul %13, %15, %cst_20 {dimension_numbers = #tpu.dot_dimension_numbers<[1], [0], [0], [1], [0, 0, 1, 1], [], []>} : vector<120x16xbf16>, vector<16x128xbf16>, vector<120x128xf32> -> vector<120x128xf32>
    %17 = arith.addf %12, %16 : vector<120x128xf32>
    %c10 = arith.constant 10 : index
    %c0_21 = arith.constant 0 : index
    %18 = vector.load %arg8[%c10, %c0_21] : memref<144x16xbf16, #tpu.memory_space<vmem>>, vector<120x16xbf16>
    %c3 = arith.constant 3 : index
    %c0_22 = arith.constant 0 : index
    %c0_23 = arith.constant 0 : index
    %19 = vector.load %arg4[%c3, %c0_22, %c0_23] : memref<9x16x128xbf16, #tpu.memory_space<vmem>>, vector<1x16x128xbf16>
    %20 = vector.shape_cast %19 : vector<1x16x128xbf16> to vector<16x128xbf16>
    %cst_24 = arith.constant dense<0.000000e+00> : vector<120x128xf32>
    %21 = tpu.matmul %18, %20, %cst_24 {dimension_numbers = #tpu.dot_dimension_numbers<[1], [0], [0], [1], [0, 0, 1, 1], [], []>} : vector<120x16xbf16>, vector<16x128xbf16>, vector<120x128xf32> -> vector<120x128xf32>
    %22 = arith.addf %17, %21 : vector<120x128xf32>
    %c11 = arith.constant 11 : index
    %c0_25 = arith.constant 0 : index
    %23 = vector.load %arg8[%c11, %c0_25] : memref<144x16xbf16, #tpu.memory_space<vmem>>, vector<120x16xbf16>
    %c4 = arith.constant 4 : index
    %c0_26 = arith.constant 0 : index
    %c0_27 = arith.constant 0 : index
    %24 = vector.load %arg4[%c4, %c0_26, %c0_27] : memref<9x16x128xbf16, #tpu.memory_space<vmem>>, vector<1x16x128xbf16>
    %25 = vector.shape_cast %24 : vector<1x16x128xbf16> to vector<16x128xbf16>
    %cst_28 = arith.constant dense<0.000000e+00> : vector<120x128xf32>
    %26 = tpu.matmul %23, %25, %cst_28 {dimension_numbers = #tpu.dot_dimension_numbers<[1], [0], [0], [1], [0, 0, 1, 1], [], []>} : vector<120x16xbf16>, vector<16x128xbf16>, vector<120x128xf32> -> vector<120x128xf32>
    %27 = arith.addf %22, %26 : vector<120x128xf32>
    %c12 = arith.constant 12 : index
    %c0_29 = arith.constant 0 : index
    %28 = vector.load %arg8[%c12, %c0_29] : memref<144x16xbf16, #tpu.memory_space<vmem>>, vector<120x16xbf16>
    %c5 = arith.constant 5 : index
    %c0_30 = arith.constant 0 : index
    %c0_31 = arith.constant 0 : index
    %29 = vector.load %arg4[%c5, %c0_30, %c0_31] : memref<9x16x128xbf16, #tpu.memory_space<vmem>>, vector<1x16x128xbf16>
    %30 = vector.shape_cast %29 : vector<1x16x128xbf16> to vector<16x128xbf16>
    %cst_32 = arith.constant dense<0.000000e+00> : vector<120x128xf32>
    %31 = tpu.matmul %28, %30, %cst_32 {dimension_numbers = #tpu.dot_dimension_numbers<[1], [0], [0], [1], [0, 0, 1, 1], [], []>} : vector<120x16xbf16>, vector<16x128xbf16>, vector<120x128xf32> -> vector<120x128xf32>
    %32 = arith.addf %27, %31 : vector<120x128xf32>
    %c20 = arith.constant 20 : index
    %c0_33 = arith.constant 0 : index
    %33 = vector.load %arg8[%c20, %c0_33] : memref<144x16xbf16, #tpu.memory_space<vmem>>, vector<120x16xbf16>
    %c6 = arith.constant 6 : index
    %c0_34 = arith.constant 0 : index
    %c0_35 = arith.constant 0 : index
    %34 = vector.load %arg4[%c6, %c0_34, %c0_35] : memref<9x16x128xbf16, #tpu.memory_space<vmem>>, vector<1x16x128xbf16>
    %35 = vector.shape_cast %34 : vector<1x16x128xbf16> to vector<16x128xbf16>
    %cst_36 = arith.constant dense<0.000000e+00> : vector<120x128xf32>
    %36 = tpu.matmul %33, %35, %cst_36 {dimension_numbers = #tpu.dot_dimension_numbers<[1], [0], [0], [1], [0, 0, 1, 1], [], []>} : vector<120x16xbf16>, vector<16x128xbf16>, vector<120x128xf32> -> vector<120x128xf32>
    %37 = arith.addf %32, %36 : vector<120x128xf32>
    %c21 = arith.constant 21 : index
    %c0_37 = arith.constant 0 : index
    %38 = vector.load %arg8[%c21, %c0_37] : memref<144x16xbf16, #tpu.memory_space<vmem>>, vector<120x16xbf16>
    %c7 = arith.constant 7 : index
    %c0_38 = arith.constant 0 : index
    %c0_39 = arith.constant 0 : index
    %39 = vector.load %arg4[%c7, %c0_38, %c0_39] : memref<9x16x128xbf16, #tpu.memory_space<vmem>>, vector<1x16x128xbf16>
    %40 = vector.shape_cast %39 : vector<1x16x128xbf16> to vector<16x128xbf16>
    %cst_40 = arith.constant dense<0.000000e+00> : vector<120x128xf32>
    %41 = tpu.matmul %38, %40, %cst_40 {dimension_numbers = #tpu.dot_dimension_numbers<[1], [0], [0], [1], [0, 0, 1, 1], [], []>} : vector<120x16xbf16>, vector<16x128xbf16>, vector<120x128xf32> -> vector<120x128xf32>
    %42 = arith.addf %37, %41 : vector<120x128xf32>
    %c22 = arith.constant 22 : index
    %c0_41 = arith.constant 0 : index
    %43 = vector.load %arg8[%c22, %c0_41] : memref<144x16xbf16, #tpu.memory_space<vmem>>, vector<120x16xbf16>
    %c8 = arith.constant 8 : index
    %c0_42 = arith.constant 0 : index
    %c0_43 = arith.constant 0 : index
    %44 = vector.load %arg4[%c8, %c0_42, %c0_43] : memref<9x16x128xbf16, #tpu.memory_space<vmem>>, vector<1x16x128xbf16>
    %45 = vector.shape_cast %44 : vector<1x16x128xbf16> to vector<16x128xbf16>
    %cst_44 = arith.constant dense<0.000000e+00> : vector<120x128xf32>
    %46 = tpu.matmul %43, %45, %cst_44 {dimension_numbers = #tpu.dot_dimension_numbers<[1], [0], [0], [1], [0, 0, 1, 1], [], []>} : vector<120x16xbf16>, vector<16x128xbf16>, vector<120x128xf32> -> vector<120x128xf32>
    %47 = arith.addf %42, %46 : vector<120x128xf32>
    %c0_45 = arith.constant 0 : index
    %c0_46 = arith.constant 0 : index
    %48 = vector.load %arg5[%c0_45, %c0_46] : memref<1x128xf32, #tpu.memory_space<vmem>>, vector<1x128xf32>
    %c0_47 = arith.constant 0 : index
    %c0_48 = arith.constant 0 : index
    %49 = vector.load %arg6[%c0_47, %c0_48] : memref<1x128xf32, #tpu.memory_space<vmem>>, vector<1x128xf32>
    %50 = vector.broadcast %48 : vector<1x128xf32> to vector<120x128xf32>
    %51 = arith.mulf %47, %50 : vector<120x128xf32>
    %52 = vector.broadcast %49 : vector<1x128xf32> to vector<120x128xf32>
    %53 = arith.addf %51, %52 : vector<120x128xf32>
    %54 = arith.truncf %53 : vector<120x128xf32> to vector<120x128xbf16>
    %c0_49 = arith.constant 0 : index
    %c0_50 = arith.constant 0 : index
    %55 = vector.load %arg7[%c0_49, %c0_50] : memref<120x128xbf16, #tpu.memory_space<vmem>>, vector<120x128xbf16>
    tpu.vector_store %arg7[%c0_49, %c0_50], %54 {strides = array<i32>} : memref<120x128xbf16, #tpu.memory_space<vmem>>, vector<120x128xbf16>,
    return
  }
  func.func @transform_0(%arg0: i32, %arg1: i32) -> (i32, i32) {
    %c0_i32 = arith.constant 0 : i32
    %c0_i32_0 = arith.constant 0 : i32
    return %arg0, %c0_i32 : i32, i32
  }
  func.func @transform_1(%arg0: i32, %arg1: i32) -> (i32, i32) {
    %c1_i32 = arith.constant 1 : i32
    %0 = arith.addi %arg0, %c1_i32 : i32
    %c5_i32 = arith.constant 5 : i32
    %1 = arith.muli %0, %c5_i32 : i32
    %c0_i32 = arith.constant 0 : i32
    %c0_i32_0 = arith.constant 0 : i32
    return %1, %c0_i32 : i32, i32
  }
  func.func @transform_2(%arg0: i32, %arg1: i32) -> (i32, i32, i32) {
    %c0_i32 = arith.constant 0 : i32
    %c0_i32_0 = arith.constant 0 : i32
    %c0_i32_1 = arith.constant 0 : i32
    return %c0_i32, %c0_i32_0, %arg1 : i32, i32, i32
  }
  func.func @transform_3(%arg0: i32, %arg1: i32) -> (i32, i32) {
    %c0_i32 = arith.constant 0 : i32
    %c0_i32_0 = arith.constant 0 : i32
    return %c0_i32, %arg1 : i32, i32
  }
  func.func @transform_4(%arg0: i32, %arg1: i32) -> (i32, i32) {
    %c0_i32 = arith.constant 0 : i32
    %c0_i32_0 = arith.constant 0 : i32
    return %c0_i32, %arg1 : i32, i32
  }
  func.func @transform_5(%arg0: i32, %arg1: i32) -> (i32, i32) {
    %c0_i32 = arith.constant 0 : i32
    return %arg0, %arg1 : i32, i32
  }
}

</mosaic_0001>

<llo_original>
// kernel: tpu_custom_call.1
$region0: #{tpu_custom_call.1}
  #allocation0 [shape = 'u32[]', space=smem, size = 0x4, offset = 0x4, fixed_abs, tag = 'smem constant byte address 0x4 - core index']
  #allocation1 [shape = 'u32[144,128]{1,0:T(1,128)}', space=vmem, size = 0x12000, scoped, tag = 'internal scratch']
  #allocation2 [shape = 'bf16[144,16]{1,0:T(16,128)(2,1)}', space=vmem, size = 0x9000, scoped, tag = 'scratch operand']
  %s0 = inlined_call_operand.vmem [shape: bf16[144,16], index: 0, kind: input, shape index: {}]
  %s1 = inlined_call_operand.vmem [shape: bf16[144,16], index: 1, kind: input, shape index: {}]
  %s2 = inlined_call_operand.vmem [shape: bf16[9,16,128], index: 2, kind: input, shape index: {}]
  %s3 = inlined_call_operand.vmem [shape: f32[1,128], index: 3, kind: input, shape index: {}]
  %s4 = inlined_call_operand.vmem [shape: f32[1,128], index: 4, kind: input, shape index: {}]
  %s5 = inlined_call_operand.hbm [shape: bf16[120,128], index: 5, kind: output, shape index: {}]
  %s6 = sld [smem:[#allocation0]]
  $region30: #{tpu_custom_call.1} parent=0
    _
  %s8 = ssub.s32 1, %s6
  %s9 = scalar_select 0, %s8, %s6
  $region1: #{tpu_custom_call.1} parent=0
    #allocation3 [shape = 'u8[30720]{0}', space=vmem, size = 0x7800, scoped, tag = 'output window, operand 0, single buffered']
    #allocation4 [shape = 's32[1]{0}', space=sflag, size = 0x4, scoped, tag = 'scoped memory for tpu_custom_call.1']
    %10 = vsyncpa [#allocation4], 0
    // Predicated region
    $region2: #{tpu_custom_call.1} parent=1 // pred_check
      _
    $region3: #{tpu_custom_call.1} parent=1 // pred_check_branch
      %12 = sbr.rel (0) target = $region5
    $region4: #{tpu_custom_call.1} parent=1 // pred_region
      _
    $region5: #{tpu_custom_call.1} parent=1 // pred_fallthru
      _
    // Predicated region
    $region6: #{tpu_custom_call.1} parent=1 // pred_check
      _
    $region7: #{tpu_custom_call.1} parent=1 // pred_check_branch
      %14 = sbr.rel (0) target = $region9
    $region8: #{tpu_custom_call.1} parent=1 // pred_region
      %s15 = sadd.s32 0, 1
      %s16 = smul.u32 %s15, 5
      %s17 = smul.u32 3, %s16
      %p18 = scmp.lt.s32.totalorder %s17, 17
      %s19 = scalar_select %p18, %s17, 17
      %s20 = smul.addr %s19, 4
      %s21 = scalar_lea.vmem %s1, %s20
      %s22 = sadd.s32 0, 1
      %s23 = smul.u32 %s22, 5
      %s24 = smul.u32 3, %s23
    $region9: #{tpu_custom_call.1} parent=1 // pred_fallthru
      _
    // Predicated region
    $region10: #{tpu_custom_call.1} parent=1 // pred_check
      _
    $region11: #{tpu_custom_call.1} parent=1 // pred_check_branch
      %26 = sbr.rel (0) target = $region13
    $region12: #{tpu_custom_call.1} parent=1 // pred_region
      _
    $region13: #{tpu_custom_call.1} parent=1 // pred_fallthru
      _
    // Predicated region
    $region14: #{tpu_custom_call.1} parent=1 // pred_check
      _
    $region15: #{tpu_custom_call.1} parent=1 // pred_check_branch
      %28 = sbr.rel (0) target = $region17
    $region16: #{tpu_custom_call.1} parent=1 // pred_region
      _
    $region17: #{tpu_custom_call.1} parent=1 // pred_fallthru
      _
    // Predicated region
    $region18: #{tpu_custom_call.1} parent=1 // pred_check
      _
    $region19: #{tpu_custom_call.1} parent=1 // pred_check_branch
      %30 = sbr.rel (0) target = $region21
    $region20: #{tpu_custom_call.1} parent=1 // pred_region
      _
    $region21: #{tpu_custom_call.1} parent=1 // pred_fallthru
      _
    %s31 = sadd.s32 0, 1
    %s32 = smul.u32 %s31, 5
    %s33 = smul.u32 3, %s32
    %p34 = scmp.lt.s32.totalorder %s33, 17
    %s35 = scalar_select %p34, %s33, 17
    %s36 = smul.addr %s35, 4
    %s37 = scalar_lea.vmem %s1, %s36
    %s38 = sadd.s32 0, 1
    %s39 = smul.u32 %s38, 5
    %s40 = smul.u32 3, %s39
    %p41 = scmp.lt.s32.totalorder %s40, 17
    %s42 = scalar_select %p41, %s40, 17
    %s43 = smul.addr %s42, 4
    %s44 = scalar_lea.vmem %s1, %s43
    %s45 = sadd.s32 0, 1
    %s46 = smul.u32 %s45, 5
    %s47 = smul.u32 3, %s46
    %v49 = vld [vmem:[%s0] sm:$0xf]
    %v50 = vld [vmem:[%s0 + $0x4] sm:$0xf]
    %v51 = vld [vmem:[%s0 + $0x8] sm:$0xf]
    %v52 = vld [vmem:[%s0 + $0xc] sm:$0xf]
    %v53 = vld [vmem:[%s0 + $0x10] sm:$0xf]
    %v54 = vld [vmem:[%s0 + $0x14] sm:$0xf]
    %v55 = vld [vmem:[%s0 + $0x18] sm:$0xf]
    %v56 = vld [vmem:[%s0 + $0x1c] sm:$0xf]
    %v57 = vld [vmem:[%s0 + $0x20] sm:$0xf]
    %v58 = vld [vmem:[%s0 + $0x24] sm:$0xf]
    %v59 = vld [vmem:[%s0 + $0x28] sm:$0xf]
    %v60 = vld [vmem:[%s0 + $0x2c] sm:$0xf]
    %v61 = vld [vmem:[%s0 + $0x30] sm:$0xf]
    %v62 = vld [vmem:[%s0 + $0x34] sm:$0xf]
    %v63 = vld [vmem:[%s0 + $0x38] sm:$0xf]
    %v79 = vunpack.c.l.b16 %v49
    %v80 = vunpack.c.l.b16 %v50
    %v81 = vunpack.c.l.b16 %v51
    %v82 = vunpack.c.l.b16 %v52
    %v83 = vunpack.c.l.b16 %v53
    %v84 = vunpack.c.l.b16 %v54
    %v85 = vunpack.c.l.b16 %v55
    %v86 = vunpack.c.l.b16 %v56
    %v87 = vunpack.c.l.b16 %v57
    %v88 = vunpack.c.l.b16 %v58
    %v89 = vunpack.c.l.b16 %v59
    %v90 = vunpack.c.l.b16 %v60
    %v91 = vunpack.c.l.b16 %v61
    %v92 = vunpack.c.l.b16 %v62
    %v93 = vunpack.c.l.b16 %v63
    %v94 = vpack.c.b16 %v80, %v79
    %v95 = vpack.c.b16 %v82, %v81
    %v96 = vpack.c.b16 %v84, %v83
    %v97 = vpack.c.b16 %v86, %v85
    %v98 = vpack.c.b16 %v88, %v87
    %v99 = vpack.c.b16 %v90, %v89
    %v100 = vpack.c.b16 %v92, %v91
    %v101 = vpack.c.b16 %v93, %v93
    %vm110 = vcmask 130048
    %111 = vst.msk [vmem:[#allocation2] sm:$0xff] %vm110, %v94
    %112 = vst.msk [vmem:[#allocation2 + $0x8] sm:$0xff] %vm110, %v95
    %113 = vst.msk [vmem:[#allocation2 + $0x10] sm:$0xff] %vm110, %v96
    %114 = vst.msk [vmem:[#allocation2 + $0x18] sm:$0xff] %vm110, %v97
    %115 = vst.msk [vmem:[#allocation2 + $0x20] sm:$0xff] %vm110, %v98
    %116 = vst.msk [vmem:[#allocation2 + $0x28] sm:$0xff] %vm110, %v99
    %117 = vst.msk [vmem:[#allocation2 + $0x30] sm:$0xff] %vm110, %v100
    %vm118 = vcmask 125952
    %119 = vst.msk [vmem:[#allocation2 + $0x38] sm:$0xf] %vm118, %v101
    %v120 = vld [vmem:[%s44] sm:$0xf]
    %v121 = vld [vmem:[%s44 + $0x4] sm:$0xf]
    %v122 = vld [vmem:[%s44 + $0x8] sm:$0xf]
    %v126 = vunpack.c.l.b16 %v120
    %v127 = vunpack.c.l.b16 %v121
    %v128 = vunpack.c.l.b16 %v122
    %v129 = vpack.c.b16 %v126, %v126
    %v130 = vpack.c.b16 %v128, %v127
    %vm133 = vcmask 130052
    %134 = vst.msk [vmem:[#allocation2 + $0x38] sm:$0xf0] %vm133, %v129
    %135 = vst.msk [vmem:[#allocation2 + $0x40] sm:$0xff] %vm110, %v130
    %v136 = vld [vmem:[#allocation2] sm:$0xff]
    %v137 = vld [vmem:[#allocation2 + $0x8] sm:$0xff]
    %v138 = vld [vmem:[#allocation2 + $0x10] sm:$0xff]
    %v139 = vld [vmem:[#allocation2 + $0x18] sm:$0xff]
    %v140 = vld [vmem:[#allocation2 + $0x20] sm:$0xff]
    %v141 = vld [vmem:[#allocation2 + $0x28] sm:$0xff]
    %v142 = vld [vmem:[#allocation2 + $0x30] sm:$0xff]
    %v143 = vld [vmem:[#allocation2 + $0x38] sm:$0xf]
    %v144 = vld [vmem:[%s2] sm:$0xf]
    %v145 = vld [vmem:[%s2 + $0x4] sm:$0xf]
    %v146 = vld [vmem:[#allocation2 + $0x38] sm:$0x1f]
    %s147 = scalar_lea.vmem %s2, 8
    %v148 = vld [vmem:[%s147] sm:$0xf]
    %v149 = vld [vmem:[%s147 + $0x4] sm:$0xf]
    %vm150 = vsmask.f32 7424
    %v152 = vshrl.u32 %v136, 16
    %v154 = vshll.u32 %v136, 16
    %v156 = vrot.slane %v154, 1
    %v157 = vor.u32 %v152, %v156
    %v159 = vshll.u32 %v137, 16
    %v161 = vrot.slane %v159, 1
    %v162 = vsel %vm150, %v157, %v161
    %v163 = vshrl.u32 %v137, 16
    %v165 = vor.u32 %v163, %v161
    %v167 = vshll.u32 %v138, 16
    %v169 = vrot.slane %v167, 1
    %v170 = vsel %vm150, %v165, %v169
    %v171 = vshrl.u32 %v138, 16
    %v173 = vor.u32 %v171, %v169
    %v175 = vshll.u32 %v139, 16
    %v177 = vrot.slane %v175, 1
    %v178 = vsel %vm150, %v173, %v177
    %v179 = vshrl.u32 %v139, 16
    %v181 = vor.u32 %v179, %v177
    %v183 = vshll.u32 %v140, 16
    %v185 = vrot.slane %v183, 1
    %v186 = vsel %vm150, %v181, %v185
    %v187 = vshrl.u32 %v140, 16
    %v189 = vor.u32 %v187, %v185
    %v191 = vshll.u32 %v141, 16
    %v193 = vrot.slane %v191, 1
    %v194 = vsel %vm150, %v189, %v193
    %v195 = vshrl.u32 %v141, 16
    %v197 = vor.u32 %v195, %v193
    %v199 = vshll.u32 %v142, 16
    %v201 = vrot.slane %v199, 1
    %v202 = vsel %vm150, %v197, %v201
    %v203 = vshrl.u32 %v142, 16
    %v205 = vor.u32 %v203, %v201
    %v207 = vshll.u32 %v146, 16
    %v209 = vrot.slane %v207, 1
    %v210 = vsel %vm150, %v205, %v209
    %v211 = vshrl.u32 %v146, 16
    %v213 = vor.u32 %v211, %v209
    %v216 = vunpack.c.l.b16 %v148
    %v217 = vunpack.c.l.b16 %v149
    %v218 = vpack.c.b16 %v217, %v216
    %v221 = vsel %vm110, %v162, 0
    %v224 = vsel %vm110, %v170, 0
    %v227 = vsel %vm110, %v178, 0
    %v230 = vsel %vm110, %v186, 0
    %v233 = vsel %vm110, %v194, 0
    %v236 = vsel %vm110, %v202, 0
    %v239 = vsel %vm110, %v210, 0
    %v242 = vsel %vm110, %v213, 0
    %244 = vmatprep.subr.bf16.mxu0 0
    %245 = vmatpush1.bf16.msra.mxu0 %v218
    %246 = vmatprep.subr.bf16.mxu0 0
    %247 = vmatpush1.bf16.msra.mxu0 0
    %248 = vmatprep.subr.bf16.mxu0 0
    %249 = vmatpush1.bf16.msra.mxu0 0
    %250 = vmatprep.subr.bf16.mxu0 0
    %251 = vmatpush1.bf16.msra.mxu0 0
    %252 = vmatprep.subr.bf16.mxu0 0
    %253 = vmatpush1.bf16.msra.mxu0 0
    %254 = vmatprep.subr.bf16.mxu0 0
    %255 = vmatpush1.bf16.msra.mxu0 0
    %256 = vmatprep.subr.bf16.mxu0 0
    %257 = vmatpush1.bf16.msra.mxu0 0
    %258 = vmatprep.subr.bf16.mxu0 0
    %259 = vmatpush1.bf16.msra.mxu0 0
    %260 = vmatprep.subr.bf16.mxu0 0
    %261 = vmatpush1.bf16.msra.mxu0 0
    %262 = vmatprep.subr.bf16.mxu0 0
    %263 = vmatpush1.bf16.msra.mxu0 0
    %264 = vmatprep.subr.bf16.mxu0 0
    %265 = vmatpush1.bf16.msra.mxu0 0
    %266 = vmatprep.subr.bf16.mxu0 0
    %267 = vmatpush1.bf16.msra.mxu0 0
    %268 = vmatprep.subr.bf16.mxu0 0
    %269 = vmatpush1.bf16.msra.mxu0 0
    %270 = vmatprep.subr.bf16.mxu0 0
    %271 = vmatpush1.bf16.msra.mxu0 0
    %272 = vmatprep.subr.bf16.mxu0 0
    %273 = vmatpush1.bf16.msra.mxu0 0
    %274 = vmatprep.subr.bf16.mxu0 0
    %275 = vmatpush1.bf16.msra.mxu0 0
    %276 = vmatprep.mubr.bf16.mxu0 0
    %277 = vmatmul.mubr.bf16.gmra.mrb[0].mxu0 %v221
    %v278 = vpop.f32.mrb[0].mxu0
    %v279 = vadd.f32 0.0, %v278
    %v280 = vpop.f32.mrb[0].mxu0
    %v281 = vpop.f32.mrb[0].mxu0
    %v282 = vadd.f32 0.0, %v281
    %v283 = vpop.f32.mrb[0].mxu0
    %284 = vmatprep.mubr.bf16.mxu0 0
    %285 = vmatmul.mubr.bf16.gmra.mrb[0].mxu0 %v224
    %v286 = vpop.f32.mrb[0].mxu0
    %v287 = vadd.f32 0.0, %v286
    %v288 = vpop.f32.mrb[0].mxu0
    %v289 = vpop.f32.mrb[0].mxu0
    %v290 = vadd.f32 0.0, %v289
    %v291 = vpop.f32.mrb[0].mxu0
    %292 = vmatprep.mubr.bf16.mxu0 0
    %293 = vmatmul.mubr.bf16.gmra.mrb[0].mxu0 %v227
    %v294 = vpop.f32.mrb[0].mxu0
    %v295 = vadd.f32 0.0, %v294
    %v296 = vpop.f32.mrb[0].mxu0
    %v297 = vpop.f32.mrb[0].mxu0
    %v298 = vadd.f32 0.0, %v297
    %v299 = vpop.f32.mrb[0].mxu0
    %300 = vmatprep.mubr.bf16.mxu0 0
    %301 = vmatmul.mubr.bf16.gmra.mrb[0].mxu0 %v230
    %v302 = vpop.f32.mrb[0].mxu0
    %v303 = vadd.f32 0.0, %v302
    %v304 = vpop.f32.mrb[0].mxu0
    %v305 = vpop.f32.mrb[0].mxu0
    %v306 = vadd.f32 0.0, %v305
    %v307 = vpop.f32.mrb[0].mxu0
    %308 = vmatprep.mubr.bf16.mxu0 0
    %309 = vmatmul.mubr.bf16.gmra.mrb[0].mxu0 %v233
    %v310 = vpop.f32.mrb[0].mxu0
    %v311 = vadd.f32 0.0, %v310
    %v312 = vpop.f32.mrb[0].mxu0
    %v313 = vpop.f32.mrb[0].mxu0
    %v314 = vadd.f32 0.0, %v313
    %v315 = vpop.f32.mrb[0].mxu0
    %316 = vmatprep.mubr.bf16.mxu0 0
    %317 = vmatmul.mubr.bf16.gmra.mrb[0].mxu0 %v236
    %v318 = vpop.f32.mrb[0].mxu0
    %v319 = vadd.f32 0.0, %v318
    %v320 = vpop.f32.mrb[0].mxu0
    %v321 = vpop.f32.mrb[0].mxu0
    %v322 = vadd.f32 0.0, %v321
    %v323 = vpop.f32.mrb[0].mxu0
    %324 = vmatprep.mubr.bf16.mxu0 0
    %325 = vmatmul.mubr.bf16.gmra.mrb[0].mxu0 %v239
    %v326 = vpop.f32.mrb[0].mxu0
    %v327 = vadd.f32 0.0, %v326
    %v328 = vpop.f32.mrb[0].mxu0
    %v329 = vpop.f32.mrb[0].mxu0
    %v330 = vadd.f32 0.0, %v329
    %v331 = vpop.f32.mrb[0].mxu0
    %332 = vmatprep.mubr.bf16.mxu0 0
    %333 = vmatmul.mubr.bf16.gmra.mrb[0].mxu0 %v242
    %v334 = vpop.f32.mrb[0].mxu0
    %v335 = vadd.f32 0.0, %v334
    %v336 = vpop.f32.mrb[0].mxu0
    %v337 = vpop.f32.mrb[0].mxu0
    %v338 = vpop.f32.mrb[0].mxu0
    %339 = vdwg.mxu0
    %v342 = vunpack.c.l.b16 %v144
    %v343 = vunpack.c.l.b16 %v145
    %v344 = vpack.c.b16 %v343, %v342
    %v346 = vsel %vm110, %v136, 0
    %v348 = vsel %vm110, %v137, 0
    %v350 = vsel %vm110, %v138, 0
    %v352 = vsel %vm110, %v139, 0
    %v354 = vsel %vm110, %v140, 0
    %v356 = vsel %vm110, %v141, 0
    %v358 = vsel %vm110, %v142, 0
    %v361 = vsel %vm110, %v143, 0
    %363 = vmatprep.subr.bf16.mxu0 0
    %364 = vmatpush1.bf16.msra.mxu0 %v344
    %365 = vmatprep.subr.bf16.mxu0 0
    %366 = vmatpush1.bf16.msra.mxu0 0
    %367 = vmatprep.subr.bf16.mxu0 0
    %368 = vmatpush1.bf16.msra.mxu0 0
    %369 = vmatprep.subr.bf16.mxu0 0
    %370 = vmatpush1.bf16.msra.mxu0 0
    %371 = vmatprep.subr.bf16.mxu0 0
    %372 = vmatpush1.bf16.msra.mxu0 0
    %373 = vmatprep.subr.bf16.mxu0 0
    %374 = vmatpush1.bf16.msra.mxu0 0
    %375 = vmatprep.subr.bf16.mxu0 0
    %376 = vmatpush1.bf16.msra.mxu0 0
    %377 = vmatprep.subr.bf16.mxu0 0
    %378 = vmatpush1.bf16.msra.mxu0 0
    %379 = vmatprep.subr.bf16.mxu0 0
    %380 = vmatpush1.bf16.msra.mxu0 0
    %381 = vmatprep.subr.bf16.mxu0 0
    %382 = vmatpush1.bf16.msra.mxu0 0
    %383 = vmatprep.subr.bf16.mxu0 0
    %384 = vmatpush1.bf16.msra.mxu0 0
    %385 = vmatprep.subr.bf16.mxu0 0
    %386 = vmatpush1.bf16.msra.mxu0 0
    %387 = vmatprep.subr.bf16.mxu0 0
    %388 = vmatpush1.bf16.msra.mxu0 0
    %389 = vmatprep.subr.bf16.mxu0 0
    %390 = vmatpush1.bf16.msra.mxu0 0
    %391 = vmatprep.subr.bf16.mxu0 0
    %392 = vmatpush1.bf16.msra.mxu0 0
    %393 = vmatprep.subr.bf16.mxu0 0
    %394 = vmatpush1.bf16.msra.mxu0 0
    %395 = vmatprep.mubr.bf16.mxu0 0
    %396 = vmatmul.mubr.bf16.gmra.mrb[0].mxu0 %v346
    %v397 = vpop.f32.mrb[0].mxu0
    %v398 = vadd.f32 %v279, %v397
    %v399 = vpop.f32.mrb[0].mxu0
    %v400 = vpop.f32.mrb[0].mxu0
    %v401 = vadd.f32 %v282, %v400
    %v402 = vpop.f32.mrb[0].mxu0
    %403 = vmatprep.mubr.bf16.mxu0 0
    %404 = vmatmul.mubr.bf16.gmra.mrb[0].mxu0 %v348
    %v405 = vpop.f32.mrb[0].mxu0
    %v406 = vadd.f32 %v287, %v405
    %v407 = vpop.f32.mrb[0].mxu0
    %v408 = vpop.f32.mrb[0].mxu0
    %v409 = vadd.f32 %v290, %v408
    %v410 = vpop.f32.mrb[0].mxu0
    %411 = vmatprep.mubr.bf16.mxu0 0
    %412 = vmatmul.mubr.bf16.gmra.mrb[0].mxu0 %v350
    %v413 = vpop.f32.mrb[0].mxu0
    %v414 = vadd.f32 %v295, %v413
    %v415 = vpop.f32.mrb[0].mxu0
    %v416 = vpop.f32.mrb[0].mxu0
    %v417 = vadd.f32 %v298, %v416
    %v418 = vpop.f32.mrb[0].mxu0
    %419 = vmatprep.mubr.bf16.mxu0 0
    %420 = vmatmul.mubr.bf16.gmra.mrb[0].mxu0 %v352
    %v421 = vpop.f32.mrb[0].mxu0
    %v422 = vadd.f32 %v303, %v421
    %v423 = vpop.f32.mrb[0].mxu0
    %v424 = vpop.f32.mrb[0].mxu0
    %v425 = vadd.f32 %v306, %v424
    %v426 = vpop.f32.mrb[0].mxu0
    %427 = vmatprep.mubr.bf16.mxu0 0
    %428 = vmatmul.mubr.bf16.gmra.mrb[0].mxu0 %v354
    %v429 = vpop.f32.mrb[0].mxu0
    %v430 = vadd.f32 %v311, %v429
    %v431 = vpop.f32.mrb[0].mxu0
    %v432 = vpop.f32.mrb[0].mxu0
    %v433 = vadd.f32 %v314, %v432
    %v434 = vpop.f32.mrb[0].mxu0
    %435 = vmatprep.mubr.bf16.mxu0 0
    %436 = vmatmul.mubr.bf16.gmra.mrb[0].mxu0 %v356
    %v437 = vpop.f32.mrb[0].mxu0
    %v438 = vadd.f32 %v319, %v437
    %v439 = vpop.f32.mrb[0].mxu0
    %v440 = vpop.f32.mrb[0].mxu0
    %v441 = vadd.f32 %v322, %v440
    %v442 = vpop.f32.mrb[0].mxu0
    %443 = vmatprep.mubr.bf16.mxu0 0
    %444 = vmatmul.mubr.bf16.gmra.mrb[0].mxu0 %v358
    %v445 = vpop.f32.mrb[0].mxu0
    %v446 = vadd.f32 %v327, %v445
    %v447 = vpop.f32.mrb[0].mxu0
    %v448 = vpop.f32.mrb[0].mxu0
    %v449 = vadd.f32 %v330, %v448
    %v450 = vpop.f32.mrb[0].mxu0
    %451 = vmatprep.mubr.bf16.mxu0 0
    %452 = vmatmul.mubr.bf16.gmra.mrb[0].mxu0 %v361
    %v453 = vpop.f32.mrb[0].mxu0
    %v454 = vadd.f32 %v335, %v453
    %v455 = vpop.f32.mrb[0].mxu0
    %v456 = vpop.f32.mrb[0].mxu0
    %v457 = vpop.f32.mrb[0].mxu0
    %458 = vdwg.mxu0
    %v459 = vld [vmem:[#allocation2] sm:$0xfe]
    %s460 = scalar_lea.vmem %s2, 16
    %v461 = vld [vmem:[%s460] sm:$0xf]
    %v462 = vld [vmem:[%s460 + $0x4] sm:$0xf]
    %vm471 = vcmask 1046528
    %v472 = vrot.slane %v459, 1
    %v473 = vrot.slane %v137, 1
    %v474 = vsel %vm471, %v472, %v473
    %v475 = vrot.slane %v138, 1
    %v476 = vsel %vm471, %v473, %v475
    %v477 = vrot.slane %v139, 1
    %v478 = vsel %vm471, %v475, %v477
    %v479 = vrot.slane %v140, 1
    %v480 = vsel %vm471, %v477, %v479
    %v481 = vrot.slane %v141, 1
    %v482 = vsel %vm471, %v479, %v481
    %v483 = vrot.slane %v142, 1
    %v484 = vsel %vm471, %v481, %v483
    %v485 = vrot.slane %v146, 1
    %v486 = vsel %vm471, %v483, %v485
    %v489 = vunpack.c.l.b16 %v461
    %v490 = vunpack.c.l.b16 %v462
    %v491 = vpack.c.b16 %v490, %v489
    %v494 = vsel %vm110, %v474, 0
    %v497 = vsel %vm110, %v476, 0
    %v500 = vsel %vm110, %v478, 0
    %v503 = vsel %vm110, %v480, 0
    %v506 = vsel %vm110, %v482, 0
    %v509 = vsel %vm110, %v484, 0
    %v512 = vsel %vm110, %v486, 0
    %v515 = vsel %vm110, %v485, 0
    %517 = vmatprep.subr.bf16.mxu0 0
    %518 = vmatpush1.bf16.msra.mxu0 %v491
    %519 = vmatprep.subr.bf16.mxu0 0
    %520 = vmatpush1.bf16.msra.mxu0 0
    %521 = vmatprep.subr.bf16.mxu0 0
    %522 = vmatpush1.bf16.msra.mxu0 0
    %523 = vmatprep.subr.bf16.mxu0 0
    %524 = vmatpush1.bf16.msra.mxu0 0
    %525 = vmatprep.subr.bf16.mxu0 0
    %526 = vmatpush1.bf16.msra.mxu0 0
    %527 = vmatprep.subr.bf16.mxu0 0
    %528 = vmatpush1.bf16.msra.mxu0 0
    %529 = vmatprep.subr.bf16.mxu0 0
    %530 = vmatpush1.bf16.msra.mxu0 0
    %531 = vmatprep.subr.bf16.mxu0 0
    %532 = vmatpush1.bf16.msra.mxu0 0
    %533 = vmatprep.subr.bf16.mxu0 0
    %534 = vmatpush1.bf16.msra.mxu0 0
    %535 = vmatprep.subr.bf16.mxu0 0
    %536 = vmatpush1.bf16.msra.mxu0 0
    %537 = vmatprep.subr.bf16.mxu0 0
    %538 = vmatpush1.bf16.msra.mxu0 0
    %539 = vmatprep.subr.bf16.mxu0 0
    %540 = vmatpush1.bf16.msra.mxu0 0
    %541 = vmatprep.subr.bf16.mxu0 0
    %542 = vmatpush1.bf16.msra.mxu0 0
    %543 = vmatprep.subr.bf16.mxu0 0
    %544 = vmatpush1.bf16.msra.mxu0 0
    %545 = vmatprep.subr.bf16.mxu0 0
    %546 = vmatpush1.bf16.msra.mxu0 0
    %547 = vmatprep.subr.bf16.mxu0 0
    %548 = vmatpush1.bf16.msra.mxu0 0
    %549 = vmatprep.mubr.bf16.mxu0 0
    %550 = vmatmul.mubr.bf16.gmra.mrb[0].mxu0 %v494
    %v551 = vpop.f32.mrb[0].mxu0
    %v552 = vadd.f32 0.0, %v551
    %v553 = vpop.f32.mrb[0].mxu0
    %v554 = vpop.f32.mrb[0].mxu0
    %v555 = vadd.f32 0.0, %v554
    %v556 = vpop.f32.mrb[0].mxu0
    %557 = vmatprep.mubr.bf16.mxu0 0
    %558 = vmatmul.mubr.bf16.gmra.mrb[0].mxu0 %v497
    %v559 = vpop.f32.mrb[0].mxu0
    %v560 = vadd.f32 0.0, %v559
    %v561 = vpop.f32.mrb[0].mxu0
    %v562 = vpop.f32.mrb[0].mxu0
    %v563 = vadd.f32 0.0, %v562
    %v564 = vpop.f32.mrb[0].mxu0
    %565 = vmatprep.mubr.bf16.mxu0 0
    %566 = vmatmul.mubr.bf16.gmra.mrb[0].mxu0 %v500
    %v567 = vpop.f32.mrb[0].mxu0
    %v568 = vadd.f32 0.0, %v567
    %v569 = vpop.f32.mrb[0].mxu0
    %v570 = vpop.f32.mrb[0].mxu0
    %v571 = vadd.f32 0.0, %v570
    %v572 = vpop.f32.mrb[0].mxu0
    %573 = vmatprep.mubr.bf16.mxu0 0
    %574 = vmatmul.mubr.bf16.gmra.mrb[0].mxu0 %v503
    %v575 = vpop.f32.mrb[0].mxu0
    %v576 = vadd.f32 0.0, %v575
    %v577 = vpop.f32.mrb[0].mxu0
    %v578 = vpop.f32.mrb[0].mxu0
    %v579 = vadd.f32 0.0, %v578
    %v580 = vpop.f32.mrb[0].mxu0
    %581 = vmatprep.mubr.bf16.mxu0 0
    %582 = vmatmul.mubr.bf16.gmra.mrb[0].mxu0 %v506
    %v583 = vpop.f32.mrb[0].mxu0
    %v584 = vadd.f32 0.0, %v583
    %v585 = vpop.f32.mrb[0].mxu0
    %v586 = vpop.f32.mrb[0].mxu0
    %v587 = vadd.f32 0.0, %v586
    %v588 = vpop.f32.mrb[0].mxu0
    %589 = vmatprep.mubr.bf16.mxu0 0
    %590 = vmatmul.mubr.bf16.gmra.mrb[0].mxu0 %v509
    %v591 = vpop.f32.mrb[0].mxu0
    %v592 = vadd.f32 0.0, %v591
    %v593 = vpop.f32.mrb[0].mxu0
    %v594 = vpop.f32.mrb[0].mxu0
    %v595 = vadd.f32 0.0, %v594
    %v596 = vpop.f32.mrb[0].mxu0
    %597 = vmatprep.mubr.bf16.mxu0 0
    %598 = vmatmul.mubr.bf16.gmra.mrb[0].mxu0 %v512
    %v599 = vpop.f32.mrb[0].mxu0
    %v600 = vadd.f32 0.0, %v599
    %v601 = vpop.f32.mrb[0].mxu0
    %v602 = vpop.f32.mrb[0].mxu0
    %v603 = vadd.f32 0.0, %v602
    %v604 = vpop.f32.mrb[0].mxu0
    %605 = vmatprep.mubr.bf16.mxu0 0
    %606 = vmatmul.mubr.bf16.gmra.mrb[0].mxu0 %v515
    %v607 = vpop.f32.mrb[0].mxu0
    %v608 = vadd.f32 0.0, %v607
    %v609 = vpop.f32.mrb[0].mxu0
    %v610 = vpop.f32.mrb[0].mxu0
    %v611 = vpop.f32.mrb[0].mxu0
    %612 = vdwg.mxu0
    %v613 = vadd.f32 %v398, %v552
    %v614 = vadd.f32 %v401, %v555
    %v615 = vadd.f32 %v406, %v560
    %v616 = vadd.f32 %v409, %v563
    %v617 = vadd.f32 %v414, %v568
    %v618 = vadd.f32 %v417, %v571
    %v619 = vadd.f32 %v422, %v576
    %v620 = vadd.f32 %v425, %v579
    %v621 = vadd.f32 %v430, %v584
    %v622 = vadd.f32 %v433, %v587
    %v623 = vadd.f32 %v438, %v592
    %v624 = vadd.f32 %v441, %v595
    %v625 = vadd.f32 %v446, %v600
    %v626 = vadd.f32 %v449, %v603
    %v627 = vadd.f32 %v454, %v608
    %v628 = vld [vmem:[#allocation2] sm:$0xe0]
    %v629 = vld [vmem:[#allocation2 + $0x8] sm:$0xff]
    %v630 = vld [vmem:[#allocation2 + $0x10] sm:$0xff]
    %v631 = vld [vmem:[#allocation2 + $0x18] sm:$0xff]
    %v632 = vld [vmem:[#allocation2 + $0x20] sm:$0xff]
    %v633 = vld [vmem:[#allocation2 + $0x28] sm:$0xff]
    %v634 = vld [vmem:[#allocation2 + $0x30] sm:$0xff]
    %v635 = vld [vmem:[#allocation2 + $0x38] sm:$0xff]
    %v636 = vld [vmem:[#allocation2 + $0x40] sm:$0x1]
    %s637 = scalar_lea.vmem %s2, 24
    %v638 = vld [vmem:[%s637] sm:$0xf]
    %v639 = vld [vmem:[%s637 + $0x4] sm:$0xf]
    %vm649 = vcmask 1042432
    %v650 = vrot.slane %v628, 5
    %v651 = vrot.slane %v629, 5
    %v652 = vsel %vm649, %v650, %v651
    %v653 = vrot.slane %v630, 5
    %v654 = vsel %vm649, %v651, %v653
    %v655 = vrot.slane %v631, 5
    %v656 = vsel %vm649, %v653, %v655
    %v657 = vrot.slane %v632, 5
    %v658 = vsel %vm649, %v655, %v657
    %v659 = vrot.slane %v633, 5
    %v660 = vsel %vm649, %v657, %v659
    %v661 = vrot.slane %v634, 5
    %v662 = vsel %vm649, %v659, %v661
    %v663 = vrot.slane %v635, 5
    %v664 = vsel %vm649, %v661, %v663
    %v665 = vrot.slane %v636, 5
    %v666 = vsel %vm649, %v663, %v665
    %v669 = vunpack.c.l.b16 %v638
    %v670 = vunpack.c.l.b16 %v639
    %v671 = vpack.c.b16 %v670, %v669
    %v674 = vsel %vm110, %v652, 0
    %v677 = vsel %vm110, %v654, 0
    %v680 = vsel %vm110, %v656, 0
    %v683 = vsel %vm110, %v658, 0
    %v686 = vsel %vm110, %v660, 0
    %v689 = vsel %vm110, %v662, 0
    %v692 = vsel %vm110, %v664, 0
    %v695 = vsel %vm110, %v666, 0
    %697 = vmatprep.subr.bf16.mxu0 0
    %698 = vmatpush1.bf16.msra.mxu0 %v671
    %699 = vmatprep.subr.bf16.mxu0 0
    %700 = vmatpush1.bf16.msra.mxu0 0
    %701 = vmatprep.subr.bf16.mxu0 0
    %702 = vmatpush1.bf16.msra.mxu0 0
    %703 = vmatprep.subr.bf16.mxu0 0
    %704 = vmatpush1.bf16.msra.mxu0 0
    %705 = vmatprep.subr.bf16.mxu0 0
    %706 = vmatpush1.bf16.msra.mxu0 0
    %707 = vmatprep.subr.bf16.mxu0 0
    %708 = vmatpush1.bf16.msra.mxu0 0
    %709 = vmatprep.subr.bf16.mxu0 0
    %710 = vmatpush1.bf16.msra.mxu0 0
    %711 = vmatprep.subr.bf16.mxu0 0
    %712 = vmatpush1.bf16.msra.mxu0 0
    %713 = vmatprep.subr.bf16.mxu0 0
    %714 = vmatpush1.bf16.msra.mxu0 0
    %715 = vmatprep.subr.bf16.mxu0 0
    %716 = vmatpush1.bf16.msra.mxu0 0
    %717 = vmatprep.subr.bf16.mxu0 0
    %718 = vmatpush1.bf16.msra.mxu0 0
    %719 = vmatprep.subr.bf16.mxu0 0
    %720 = vmatpush1.bf16.msra.mxu0 0
    %721 = vmatprep.subr.bf16.mxu0 0
    %722 = vmatpush1.bf16.msra.mxu0 0
    %723 = vmatprep.subr.bf16.mxu0 0
    %724 = vmatpush1.bf16.msra.mxu0 0
    %725 = vmatprep.subr.bf16.mxu0 0
    %726 = vmatpush1.bf16.msra.mxu0 0
    %727 = vmatprep.subr.bf16.mxu0 0
    %728 = vmatpush1.bf16.msra.mxu0 0
    %729 = vmatprep.mubr.bf16.mxu0 0
    %730 = vmatmul.mubr.bf16.gmra.mrb[0].mxu0 %v674
    %v731 = vpop.f32.mrb[0].mxu0
    %v732 = vadd.f32 0.0, %v731
    %v733 = vpop.f32.mrb[0].mxu0
    %v734 = vpop.f32.mrb[0].mxu0
    %v735 = vadd.f32 0.0, %v734
    %v736 = vpop.f32.mrb[0].mxu0
    %737 = vmatprep.mubr.bf16.mxu0 0
    %738 = vmatmul.mubr.bf16.gmra.mrb[0].mxu0 %v677
    %v739 = vpop.f32.mrb[0].mxu0
    %v740 = vadd.f32 0.0, %v739
    %v741 = vpop.f32.mrb[0].mxu0
    %v742 = vpop.f32.mrb[0].mxu0
    %v743 = vadd.f32 0.0, %v742
    %v744 = vpop.f32.mrb[0].mxu0
    %745 = vmatprep.mubr.bf16.mxu0 0
    %746 = vmatmul.mubr.bf16.gmra.mrb[0].mxu0 %v680
    %v747 = vpop.f32.mrb[0].mxu0
    %v748 = vadd.f32 0.0, %v747
    %v749 = vpop.f32.mrb[0].mxu0
    %v750 = vpop.f32.mrb[0].mxu0
    %v751 = vadd.f32 0.0, %v750
    %v752 = vpop.f32.mrb[0].mxu0
    %753 = vmatprep.mubr.bf16.mxu0 0
    %754 = vmatmul.mubr.bf16.gmra.mrb[0].mxu0 %v683
    %v755 = vpop.f32.mrb[0].mxu0
    %v756 = vadd.f32 0.0, %v755
    %v757 = vpop.f32.mrb[0].mxu0
    %v758 = vpop.f32.mrb[0].mxu0
    %v759 = vadd.f32 0.0, %v758
    %v760 = vpop.f32.mrb[0].mxu0
    %761 = vmatprep.mubr.bf16.mxu0 0
    %762 = vmatmul.mubr.bf16.gmra.mrb[0].mxu0 %v686
    %v763 = vpop.f32.mrb[0].mxu0
    %v764 = vadd.f32 0.0, %v763
    %v765 = vpop.f32.mrb[0].mxu0
    %v766 = vpop.f32.mrb[0].mxu0
    %v767 = vadd.f32 0.0, %v766
    %v768 = vpop.f32.mrb[0].mxu0
    %769 = vmatprep.mubr.bf16.mxu0 0
    %770 = vmatmul.mubr.bf16.gmra.mrb[0].mxu0 %v689
    %v771 = vpop.f32.mrb[0].mxu0
    %v772 = vadd.f32 0.0, %v771
    %v773 = vpop.f32.mrb[0].mxu0
    %v774 = vpop.f32.mrb[0].mxu0
    %v775 = vadd.f32 0.0, %v774
    %v776 = vpop.f32.mrb[0].mxu0
    %777 = vmatprep.mubr.bf16.mxu0 0
    %778 = vmatmul.mubr.bf16.gmra.mrb[0].mxu0 %v692
    %v779 = vpop.f32.mrb[0].mxu0
    %v780 = vadd.f32 0.0, %v779
    %v781 = vpop.f32.mrb[0].mxu0
    %v782 = vpop.f32.mrb[0].mxu0
    %v783 = vadd.f32 0.0, %v782
    %v784 = vpop.f32.mrb[0].mxu0
    %785 = vmatprep.mubr.bf16.mxu0 0
    %786 = vmatmul.mubr.bf16.gmra.mrb[0].mxu0 %v695
    %v787 = vpop.f32.mrb[0].mxu0
    %v788 = vadd.f32 0.0, %v787
    %v789 = vpop.f32.mrb[0].mxu0
    %v790 = vpop.f32.mrb[0].mxu0
    %v791 = vpop.f32.mrb[0].mxu0
    %792 = vdwg.mxu0
    %v793 = vadd.f32 %v613, %v732
    %v794 = vadd.f32 %v614, %v735
    %v795 = vadd.f32 %v615, %v740
    %v796 = vadd.f32 %v616, %v743
    %v797 = vadd.f32 %v617, %v748
    %v798 = vadd.f32 %v618, %v751
    %v799 = vadd.f32 %v619, %v756
    %v800 = vadd.f32 %v620, %v759
    %v801 = vadd.f32 %v621, %v764
    %v802 = vadd.f32 %v622, %v767
    %v803 = vadd.f32 %v623, %v772
    %v804 = vadd.f32 %v624, %v775
    %v805 = vadd.f32 %v625, %v780
    %v806 = vadd.f32 %v626, %v783
    %v807 = vadd.f32 %v627, %v788
    %v808 = vld [vmem:[#allocation2 + $0x40] sm:$0x3]
    %s809 = scalar_lea.vmem %s2, 32
    %v810 = vld [vmem:[%s809] sm:$0xf]
    %v811 = vld [vmem:[%s809 + $0x4] sm:$0xf]
    %vm812 = vsmask.f32 2304
    %v814 = vshrl.u32 %v628, 16
    %v816 = vrot.slane %v814, 5
    %v817 = vshll.u32 %v628, 16
    %v819 = vrot.slane %v817, 6
    %v820 = vor.u32 %v816, %v819
    %v822 = vshrl.u32 %v629, 16
    %v824 = vrot.slane %v822, 5
    %v825 = vshll.u32 %v629, 16
    %v827 = vrot.slane %v825, 6
    %v828 = vor.u32 %v824, %v827
    %v829 = vsel %vm812, %v820, %v828
    %v831 = vshrl.u32 %v630, 16
    %v833 = vrot.slane %v831, 5
    %v834 = vshll.u32 %v630, 16
    %v836 = vrot.slane %v834, 6
    %v837 = vor.u32 %v833, %v836
    %v838 = vsel %vm812, %v828, %v837
    %v840 = vshrl.u32 %v631, 16
    %v842 = vrot.slane %v840, 5
    %v843 = vshll.u32 %v631, 16
    %v845 = vrot.slane %v843, 6
    %v846 = vor.u32 %v842, %v845
    %v847 = vsel %vm812, %v837, %v846
    %v849 = vshrl.u32 %v632, 16
    %v851 = vrot.slane %v849, 5
    %v852 = vshll.u32 %v632, 16
    %v854 = vrot.slane %v852, 6
    %v855 = vor.u32 %v851, %v854
    %v856 = vsel %vm812, %v846, %v855
    %v858 = vshrl.u32 %v633, 16
    %v860 = vrot.slane %v858, 5
    %v861 = vshll.u32 %v633, 16
    %v863 = vrot.slane %v861, 6
    %v864 = vor.u32 %v860, %v863
    %v865 = vsel %vm812, %v855, %v864
    %v867 = vshrl.u32 %v634, 16
    %v869 = vrot.slane %v867, 5
    %v870 = vshll.u32 %v634, 16
    %v872 = vrot.slane %v870, 6
    %v873 = vor.u32 %v869, %v872
    %v874 = vsel %vm812, %v864, %v873
    %v876 = vshrl.u32 %v635, 16
    %v878 = vrot.slane %v876, 5
    %v879 = vshll.u32 %v635, 16
    %v881 = vrot.slane %v879, 6
    %v882 = vor.u32 %v878, %v881
    %v883 = vsel %vm812, %v873, %v882
    %v885 = vshrl.u32 %v808, 16
    %v887 = vrot.slane %v885, 5
    %v888 = vshll.u32 %v808, 16
    %v890 = vrot.slane %v888, 6
    %v891 = vor.u32 %v887, %v890
    %v892 = vsel %vm812, %v882, %v891
    %v895 = vunpack.c.l.b16 %v810
    %v896 = vunpack.c.l.b16 %v811
    %v897 = vpack.c.b16 %v896, %v895
    %v900 = vsel %vm110, %v829, 0
    %v903 = vsel %vm110, %v838, 0
    %v906 = vsel %vm110, %v847, 0
    %v909 = vsel %vm110, %v856, 0
    %v912 = vsel %vm110, %v865, 0
    %v915 = vsel %vm110, %v874, 0
    %v918 = vsel %vm110, %v883, 0
    %v921 = vsel %vm110, %v892, 0
    %923 = vmatprep.subr.bf16.mxu0 0
    %924 = vmatpush1.bf16.msra.mxu0 %v897
    %925 = vmatprep.subr.bf16.mxu0 0
    %926 = vmatpush1.bf16.msra.mxu0 0
    %927 = vmatprep.subr.bf16.mxu0 0
    %928 = vmatpush1.bf16.msra.mxu0 0
    %929 = vmatprep.subr.bf16.mxu0 0
    %930 = vmatpush1.bf16.msra.mxu0 0
    %931 = vmatprep.subr.bf16.mxu0 0
    %932 = vmatpush1.bf16.msra.mxu0 0
    %933 = vmatprep.subr.bf16.mxu0 0
    %934 = vmatpush1.bf16.msra.mxu0 0
    %935 = vmatprep.subr.bf16.mxu0 0
    %936 = vmatpush1.bf16.msra.mxu0 0
    %937 = vmatprep.subr.bf16.mxu0 0
    %938 = vmatpush1.bf16.msra.mxu0 0
    %939 = vmatprep.subr.bf16.mxu0 0
    %940 = vmatpush1.bf16.msra.mxu0 0
    %941 = vmatprep.subr.bf16.mxu0 0
    %942 = vmatpush1.bf16.msra.mxu0 0
    %943 = vmatprep.subr.bf16.mxu0 0
    %944 = vmatpush1.bf16.msra.mxu0 0
    %945 = vmatprep.subr.bf16.mxu0 0
    %946 = vmatpush1.bf16.msra.mxu0 0
    %947 = vmatprep.subr.bf16.mxu0 0
    %948 = vmatpush1.bf16.msra.mxu0 0
    %949 = vmatprep.subr.bf16.mxu0 0
    %950 = vmatpush1.bf16.msra.mxu0 0
    %951 = vmatprep.subr.bf16.mxu0 0
    %952 = vmatpush1.bf16.msra.mxu0 0
    %953 = vmatprep.subr.bf16.mxu0 0
    %954 = vmatpush1.bf16.msra.mxu0 0
    %955 = vmatprep.mubr.bf16.mxu0 0
    %956 = vmatmul.mubr.bf16.gmra.mrb[0].mxu0 %v900
    %v957 = vpop.f32.mrb[0].mxu0
    %v958 = vadd.f32 0.0, %v957
    %v959 = vpop.f32.mrb[0].mxu0
    %v960 = vpop.f32.mrb[0].mxu0
    %v961 = vadd.f32 0.0, %v960
    %v962 = vpop.f32.mrb[0].mxu0
    %963 = vmatprep.mubr.bf16.mxu0 0
    %964 = vmatmul.mubr.bf16.gmra.mrb[0].mxu0 %v903
    %v965 = vpop.f32.mrb[0].mxu0
    %v966 = vadd.f32 0.0, %v965
    %v967 = vpop.f32.mrb[0].mxu0
    %v968 = vpop.f32.mrb[0].mxu0
    %v969 = vadd.f32 0.0, %v968
    %v970 = vpop.f32.mrb[0].mxu0
    %971 = vmatprep.mubr.bf16.mxu0 0
    %972 = vmatmul.mubr.bf16.gmra.mrb[0].mxu0 %v906
    %v973 = vpop.f32.mrb[0].mxu0
    %v974 = vadd.f32 0.0, %v973
    %v975 = vpop.f32.mrb[0].mxu0
    %v976 = vpop.f32.mrb[0].mxu0
    %v977 = vadd.f32 0.0, %v976
    %v978 = vpop.f32.mrb[0].mxu0
    %979 = vmatprep.mubr.bf16.mxu0 0
    %980 = vmatmul.mubr.bf16.gmra.mrb[0].mxu0 %v909
    %v981 = vpop.f32.mrb[0].mxu0
    %v982 = vadd.f32 0.0, %v981
    %v983 = vpop.f32.mrb[0].mxu0
    %v984 = vpop.f32.mrb[0].mxu0
    %v985 = vadd.f32 0.0, %v984
    %v986 = vpop.f32.mrb[0].mxu0
    %987 = vmatprep.mubr.bf16.mxu0 0
    %988 = vmatmul.mubr.bf16.gmra.mrb[0].mxu0 %v912
    %v989 = vpop.f32.mrb[0].mxu0
    %v990 = vadd.f32 0.0, %v989
    %v991 = vpop.f32.mrb[0].mxu0
    %v992 = vpop.f32.mrb[0].mxu0
    %v993 = vadd.f32 0.0, %v992
    %v994 = vpop.f32.mrb[0].mxu0
    %995 = vmatprep.mubr.bf16.mxu0 0
    %996 = vmatmul.mubr.bf16.gmra.mrb[0].mxu0 %v915
    %v997 = vpop.f32.mrb[0].mxu0
    %v998 = vadd.f32 0.0, %v997
    %v999 = vpop.f32.mrb[0].mxu0
    %v1000 = vpop.f32.mrb[0].mxu0
    %v1001 = vadd.f32 0.0, %v1000
    %v1002 = vpop.f32.mrb[0].mxu0
    %1003 = vmatprep.mubr.bf16.mxu0 0
    %1004 = vmatmul.mubr.bf16.gmra.mrb[0].mxu0 %v918
    %v1005 = vpop.f32.mrb[0].mxu0
    %v1006 = vadd.f32 0.0, %v1005
    %v1007 = vpop.f32.mrb[0].mxu0
    %v1008 = vpop.f32.mrb[0].mxu0
    %v1009 = vadd.f32 0.0, %v1008
    %v1010 = vpop.f32.mrb[0].mxu0
    %1011 = vmatprep.mubr.bf16.mxu0 0
    %1012 = vmatmul.mubr.bf16.gmra.mrb[0].mxu0 %v921
    %v1013 = vpop.f32.mrb[0].mxu0
    %v1014 = vadd.f32 0.0, %v1013
    %v1015 = vpop.f32.mrb[0].mxu0
    %v1016 = vpop.f32.mrb[0].mxu0
    %v1017 = vpop.f32.mrb[0].mxu0
    %1018 = vdwg.mxu0
    %v1019 = vadd.f32 %v793, %v958
    %v1020 = vadd.f32 %v794, %v961
    %v1021 = vadd.f32 %v795, %v966
    %v1022 = vadd.f32 %v796, %v969
    %v1023 = vadd.f32 %v797, %v974
    %v1024 = vadd.f32 %v798, %v977
    %v1025 = vadd.f32 %v799, %v982
    %v1026 = vadd.f32 %v800, %v985
    %v1027 = vadd.f32 %v801, %v990
    %v1028 = vadd.f32 %v802, %v993
    %v1029 = vadd.f32 %v803, %v998
    %v1030 = vadd.f32 %v804, %v1001
    %v1031 = vadd.f32 %v805, %v1006
    %v1032 = vadd.f32 %v806, %v1009
    %v1033 = vadd.f32 %v807, %v1014
    %v1034 = vld [vmem:[#allocation2] sm:$0xc0]
    %s1035 = scalar_lea.vmem %s2, 40
    %v1036 = vld [vmem:[%s1035] sm:$0xf]
    %v1037 = vld [vmem:[%s1035 + $0x4] sm:$0xf]
    %vm1040 = vcmask 1041408
    %v1041 = vrot.slane %v1034, 6
    %v1042 = vrot.slane %v629, 6
    %v1043 = vsel %vm1040, %v1041, %v1042
    %v1044 = vrot.slane %v630, 6
    %v1045 = vsel %vm1040, %v1042, %v1044
    %v1046 = vrot.slane %v631, 6
    %v1047 = vsel %vm1040, %v1044, %v1046
    %v1048 = vrot.slane %v632, 6
    %v1049 = vsel %vm1040, %v1046, %v1048
    %v1050 = vrot.slane %v633, 6
    %v1051 = vsel %vm1040, %v1048, %v1050
    %v1052 = vrot.slane %v634, 6
    %v1053 = vsel %vm1040, %v1050, %v1052
    %v1054 = vrot.slane %v635, 6
    %v1055 = vsel %vm1040, %v1052, %v1054
    %v1056 = vrot.slane %v808, 6
    %v1057 = vsel %vm1040, %v1054, %v1056
    %v1060 = vunpack.c.l.b16 %v1036
    %v1061 = vunpack.c.l.b16 %v1037
    %v1062 = vpack.c.b16 %v1061, %v1060
    %v1065 = vsel %vm110, %v1043, 0
    %v1068 = vsel %vm110, %v1045, 0
    %v1071 = vsel %vm110, %v1047, 0
    %v1074 = vsel %vm110, %v1049, 0
    %v1077 = vsel %vm110, %v1051, 0
    %v1080 = vsel %vm110, %v1053, 0
    %v1083 = vsel %vm110, %v1055, 0
    %v1086 = vsel %vm110, %v1057, 0
    %1088 = vmatprep.subr.bf16.mxu0 0
    %1089 = vmatpush1.bf16.msra.mxu0 %v1062
    %1090 = vmatprep.subr.bf16.mxu0 0
    %1091 = vmatpush1.bf16.msra.mxu0 0
    %1092 = vmatprep.subr.bf16.mxu0 0
    %1093 = vmatpush1.bf16.msra.mxu0 0
    %1094 = vmatprep.subr.bf16.mxu0 0
    %1095 = vmatpush1.bf16.msra.mxu0 0
    %1096 = vmatprep.subr.bf16.mxu0 0
    %1097 = vmatpush1.bf16.msra.mxu0 0
    %1098 = vmatprep.subr.bf16.mxu0 0
    %1099 = vmatpush1.bf16.msra.mxu0 0
    %1100 = vmatprep.subr.bf16.mxu0 0
    %1101 = vmatpush1.bf16.msra.mxu0 0
    %1102 = vmatprep.subr.bf16.mxu0 0
    %1103 = vmatpush1.bf16.msra.mxu0 0
    %1104 = vmatprep.subr.bf16.mxu0 0
    %1105 = vmatpush1.bf16.msra.mxu0 0
    %1106 = vmatprep.subr.bf16.mxu0 0
    %1107 = vmatpush1.bf16.msra.mxu0 0
    %1108 = vmatprep.subr.bf16.mxu0 0
    %1109 = vmatpush1.bf16.msra.mxu0 0
    %1110 = vmatprep.subr.bf16.mxu0 0
    %1111 = vmatpush1.bf16.msra.mxu0 0
    %1112 = vmatprep.subr.bf16.mxu0 0
    %1113 = vmatpush1.bf16.msra.mxu0 0
    %1114 = vmatprep.subr.bf16.mxu0 0
    %1115 = vmatpush1.bf16.msra.mxu0 0
    %1116 = vmatprep.subr.bf16.mxu0 0
    %1117 = vmatpush1.bf16.msra.mxu0 0
    %1118 = vmatprep.subr.bf16.mxu0 0
    %1119 = vmatpush1.bf16.msra.mxu0 0
    %1120 = vmatprep.mubr.bf16.mxu0 0
    %1121 = vmatmul.mubr.bf16.gmra.mrb[0].mxu0 %v1065
    %v1122 = vpop.f32.mrb[0].mxu0
    %v1123 = vadd.f32 0.0, %v1122
    %v1124 = vpop.f32.mrb[0].mxu0
    %v1125 = vpop.f32.mrb[0].mxu0
    %v1126 = vadd.f32 0.0, %v1125
    %v1127 = vpop.f32.mrb[0].mxu0
    %1128 = vmatprep.mubr.bf16.mxu0 0
    %1129 = vmatmul.mubr.bf16.gmra.mrb[0].mxu0 %v1068
    %v1130 = vpop.f32.mrb[0].mxu0
    %v1131 = vadd.f32 0.0, %v1130
    %v1132 = vpop.f32.mrb[0].mxu0
    %v1133 = vpop.f32.mrb[0].mxu0
    %v1134 = vadd.f32 0.0, %v1133
    %v1135 = vpop.f32.mrb[0].mxu0
    %1136 = vmatprep.mubr.bf16.mxu0 0
    %1137 = vmatmul.mubr.bf16.gmra.mrb[0].mxu0 %v1071
    %v1138 = vpop.f32.mrb[0].mxu0
    %v1139 = vadd.f32 0.0, %v1138
    %v1140 = vpop.f32.mrb[0].mxu0
    %v1141 = vpop.f32.mrb[0].mxu0
    %v1142 = vadd.f32 0.0, %v1141
    %v1143 = vpop.f32.mrb[0].mxu0
    %1144 = vmatprep.mubr.bf16.mxu0 0
    %1145 = vmatmul.mubr.bf16.gmra.mrb[0].mxu0 %v1074
    %v1146 = vpop.f32.mrb[0].mxu0
    %v1147 = vadd.f32 0.0, %v1146
    %v1148 = vpop.f32.mrb[0].mxu0
    %v1149 = vpop.f32.mrb[0].mxu0
    %v1150 = vadd.f32 0.0, %v1149
    %v1151 = vpop.f32.mrb[0].mxu0
    %1152 = vmatprep.mubr.bf16.mxu0 0
    %1153 = vmatmul.mubr.bf16.gmra.mrb[0].mxu0 %v1077
    %v1154 = vpop.f32.mrb[0].mxu0
    %v1155 = vadd.f32 0.0, %v1154
    %v1156 = vpop.f32.mrb[0].mxu0
    %v1157 = vpop.f32.mrb[0].mxu0
    %v1158 = vadd.f32 0.0, %v1157
    %v1159 = vpop.f32.mrb[0].mxu0
    %1160 = vmatprep.mubr.bf16.mxu0 0
    %1161 = vmatmul.mubr.bf16.gmra.mrb[0].mxu0 %v1080
    %v1162 = vpop.f32.mrb[0].mxu0
    %v1163 = vadd.f32 0.0, %v1162
    %v1164 = vpop.f32.mrb[0].mxu0
    %v1165 = vpop.f32.mrb[0].mxu0
    %v1166 = vadd.f32 0.0, %v1165
    %v1167 = vpop.f32.mrb[0].mxu0
    %1168 = vmatprep.mubr.bf16.mxu0 0
    %1169 = vmatmul.mubr.bf16.gmra.mrb[0].mxu0 %v1083
    %v1170 = vpop.f32.mrb[0].mxu0
    %v1171 = vadd.f32 0.0, %v1170
    %v1172 = vpop.f32.mrb[0].mxu0
    %v1173 = vpop.f32.mrb[0].mxu0
    %v1174 = vadd.f32 0.0, %v1173
    %v1175 = vpop.f32.mrb[0].mxu0
    %1176 = vmatprep.mubr.bf16.mxu0 0
    %1177 = vmatmul.mubr.bf16.gmra.mrb[0].mxu0 %v1086
    %v1178 = vpop.f32.mrb[0].mxu0
    %v1179 = vadd.f32 0.0, %v1178
    %v1180 = vpop.f32.mrb[0].mxu0
    %v1181 = vpop.f32.mrb[0].mxu0
    %v1182 = vpop.f32.mrb[0].mxu0
    %1183 = vdwg.mxu0
    %v1184 = vadd.f32 %v1019, %v1123
    %v1185 = vadd.f32 %v1020, %v1126
    %v1186 = vadd.f32 %v1021, %v1131
    %v1187 = vadd.f32 %v1022, %v1134
    %v1188 = vadd.f32 %v1023, %v1139
    %v1189 = vadd.f32 %v1024, %v1142
    %v1190 = vadd.f32 %v1025, %v1147
    %v1191 = vadd.f32 %v1026, %v1150
    %v1192 = vadd.f32 %v1027, %v1155
    %v1193 = vadd.f32 %v1028, %v1158
    %v1194 = vadd.f32 %v1029, %v1163
    %v1195 = vadd.f32 %v1030, %v1166
    %v1196 = vadd.f32 %v1031, %v1171
    %v1197 = vadd.f32 %v1032, %v1174
    %v1198 = vadd.f32 %v1033, %v1179
    %v1199 = vld [vmem:[#allocation2 + $0x8] sm:$0xfc]
    %v1200 = vld [vmem:[#allocation2 + $0x40] sm:$0x3f]
    %s1201 = scalar_lea.vmem %s2, 48
    %v1202 = vld [vmem:[%s1201] sm:$0xf]
    %v1203 = vld [vmem:[%s1201 + $0x4] sm:$0xf]
    %vm1206 = vcmask 1045504
    %v1207 = vrot.slane %v1199, 2
    %v1208 = vrot.slane %v630, 2
    %v1209 = vsel %vm1206, %v1207, %v1208
    %v1210 = vrot.slane %v631, 2
    %v1211 = vsel %vm1206, %v1208, %v1210
    %v1212 = vrot.slane %v632, 2
    %v1213 = vsel %vm1206, %v1210, %v1212
    %v1214 = vrot.slane %v633, 2
    %v1215 = vsel %vm1206, %v1212, %v1214
    %v1216 = vrot.slane %v634, 2
    %v1217 = vsel %vm1206, %v1214, %v1216
    %v1218 = vrot.slane %v635, 2
    %v1219 = vsel %vm1206, %v1216, %v1218
    %v1220 = vrot.slane %v1200, 2
    %v1221 = vsel %vm1206, %v1218, %v1220
    %v1224 = vunpack.c.l.b16 %v1202
    %v1225 = vunpack.c.l.b16 %v1203
    %v1226 = vpack.c.b16 %v1225, %v1224
    %v1229 = vsel %vm110, %v1209, 0
    %v1232 = vsel %vm110, %v1211, 0
    %v1235 = vsel %vm110, %v1213, 0
    %v1238 = vsel %vm110, %v1215, 0
    %v1241 = vsel %vm110, %v1217, 0
    %v1244 = vsel %vm110, %v1219, 0
    %v1247 = vsel %vm110, %v1221, 0
    %v1250 = vsel %vm110, %v1220, 0
    %1252 = vmatprep.subr.bf16.mxu0 0
    %1253 = vmatpush1.bf16.msra.mxu0 %v1226
    %1254 = vmatprep.subr.bf16.mxu0 0
    %1255 = vmatpush1.bf16.msra.mxu0 0
    %1256 = vmatprep.subr.bf16.mxu0 0
    %1257 = vmatpush1.bf16.msra.mxu0 0
    %1258 = vmatprep.subr.bf16.mxu0 0
    %1259 = vmatpush1.bf16.msra.mxu0 0
    %1260 = vmatprep.subr.bf16.mxu0 0
    %1261 = vmatpush1.bf16.msra.mxu0 0
    %1262 = vmatprep.subr.bf16.mxu0 0
    %1263 = vmatpush1.bf16.msra.mxu0 0
    %1264 = vmatprep.subr.bf16.mxu0 0
    %1265 = vmatpush1.bf16.msra.mxu0 0
    %1266 = vmatprep.subr.bf16.mxu0 0
    %1267 = vmatpush1.bf16.msra.mxu0 0
    %1268 = vmatprep.subr.bf16.mxu0 0
    %1269 = vmatpush1.bf16.msra.mxu0 0
    %1270 = vmatprep.subr.bf16.mxu0 0
    %1271 = vmatpush1.bf16.msra.mxu0 0
    %1272 = vmatprep.subr.bf16.mxu0 0
    %1273 = vmatpush1.bf16.msra.mxu0 0
    %1274 = vmatprep.subr.bf16.mxu0 0
    %1275 = vmatpush1.bf16.msra.mxu0 0
    %1276 = vmatprep.subr.bf16.mxu0 0
    %1277 = vmatpush1.bf16.msra.mxu0 0
    %1278 = vmatprep.subr.bf16.mxu0 0
    %1279 = vmatpush1.bf16.msra.mxu0 0
    %1280 = vmatprep.subr.bf16.mxu0 0
    %1281 = vmatpush1.bf16.msra.mxu0 0
    %1282 = vmatprep.subr.bf16.mxu0 0
    %1283 = vmatpush1.bf16.msra.mxu0 0
    %1284 = vmatprep.mubr.bf16.mxu0 0
    %1285 = vmatmul.mubr.bf16.gmra.mrb[0].mxu0 %v1229
    %v1286 = vpop.f32.mrb[0].mxu0
    %v1287 = vadd.f32 0.0, %v1286
    %v1288 = vpop.f32.mrb[0].mxu0
    %v1289 = vpop.f32.mrb[0].mxu0
    %v1290 = vadd.f32 0.0, %v1289
    %v1291 = vpop.f32.mrb[0].mxu0
    %1292 = vmatprep.mubr.bf16.mxu0 0
    %1293 = vmatmul.mubr.bf16.gmra.mrb[0].mxu0 %v1232
    %v1294 = vpop.f32.mrb[0].mxu0
    %v1295 = vadd.f32 0.0, %v1294
    %v1296 = vpop.f32.mrb[0].mxu0
    %v1297 = vpop.f32.mrb[0].mxu0
    %v1298 = vadd.f32 0.0, %v1297
    %v1299 = vpop.f32.mrb[0].mxu0
    %1300 = vmatprep.mubr.bf16.mxu0 0
    %1301 = vmatmul.mubr.bf16.gmra.mrb[0].mxu0 %v1235
    %v1302 = vpop.f32.mrb[0].mxu0
    %v1303 = vadd.f32 0.0, %v1302
    %v1304 = vpop.f32.mrb[0].mxu0
    %v1305 = vpop.f32.mrb[0].mxu0
    %v1306 = vadd.f32 0.0, %v1305
    %v1307 = vpop.f32.mrb[0].mxu0
    %1308 = vmatprep.mubr.bf16.mxu0 0
    %1309 = vmatmul.mubr.bf16.gmra.mrb[0].mxu0 %v1238
    %v1310 = vpop.f32.mrb[0].mxu0
    %v1311 = vadd.f32 0.0, %v1310
    %v1312 = vpop.f32.mrb[0].mxu0
    %v1313 = vpop.f32.mrb[0].mxu0
    %v1314 = vadd.f32 0.0, %v1313
    %v1315 = vpop.f32.mrb[0].mxu0
    %1316 = vmatprep.mubr.bf16.mxu0 0
    %1317 = vmatmul.mubr.bf16.gmra.mrb[0].mxu0 %v1241
    %v1318 = vpop.f32.mrb[0].mxu0
    %v1319 = vadd.f32 0.0, %v1318
    %v1320 = vpop.f32.mrb[0].mxu0
    %v1321 = vpop.f32.mrb[0].mxu0
    %v1322 = vadd.f32 0.0, %v1321
    %v1323 = vpop.f32.mrb[0].mxu0
    %1324 = vmatprep.mubr.bf16.mxu0 0
    %1325 = vmatmul.mubr.bf16.gmra.mrb[0].mxu0 %v1244
    %v1326 = vpop.f32.mrb[0].mxu0
    %v1327 = vadd.f32 0.0, %v1326
    %v1328 = vpop.f32.mrb[0].mxu0
    %v1329 = vpop.f32.mrb[0].mxu0
    %v1330 = vadd.f32 0.0, %v1329
    %v1331 = vpop.f32.mrb[0].mxu0
    %1332 = vmatprep.mubr.bf16.mxu0 0
    %1333 = vmatmul.mubr.bf16.gmra.mrb[0].mxu0 %v1247
    %v1334 = vpop.f32.mrb[0].mxu0
    %v1335 = vadd.f32 0.0, %v1334
    %v1336 = vpop.f32.mrb[0].mxu0
    %v1337 = vpop.f32.mrb[0].mxu0
    %v1338 = vadd.f32 0.0, %v1337
    %v1339 = vpop.f32.mrb[0].mxu0
    %1340 = vmatprep.mubr.bf16.mxu0 0
    %1341 = vmatmul.mubr.bf16.gmra.mrb[0].mxu0 %v1250
    %v1342 = vpop.f32.mrb[0].mxu0
    %v1343 = vadd.f32 0.0, %v1342
    %v1344 = vpop.f32.mrb[0].mxu0
    %v1345 = vpop.f32.mrb[0].mxu0
    %v1346 = vpop.f32.mrb[0].mxu0
    %1347 = vdwg.mxu0
    %v1348 = vadd.f32 %v1184, %v1287
    %v1349 = vadd.f32 %v1185, %v1290
    %v1350 = vadd.f32 %v1186, %v1295
    %v1351 = vadd.f32 %v1187, %v1298
    %v1352 = vadd.f32 %v1188, %v1303
    %v1353 = vadd.f32 %v1189, %v1306
    %v1354 = vadd.f32 %v1190, %v1311
    %v1355 = vadd.f32 %v1191, %v1314
    %v1356 = vadd.f32 %v1192, %v1319
    %v1357 = vadd.f32 %v1193, %v1322
    %v1358 = vadd.f32 %v1194, %v1327
    %v1359 = vadd.f32 %v1195, %v1330
    %v1360 = vadd.f32 %v1196, %v1335
    %v1361 = vadd.f32 %v1197, %v1338
    %v1362 = vadd.f32 %v1198, %v1343
    %v1363 = vld [vmem:[#allocation2 + $0x40] sm:$0x7f]
    %s1364 = scalar_lea.vmem %s2, 56
    %v1365 = vld [vmem:[%s1364] sm:$0xf]
    %v1366 = vld [vmem:[%s1364 + $0x4] sm:$0xf]
    %vm1367 = vsmask.f32 5376
    %v1369 = vshrl.u32 %v1199, 16
    %v1371 = vrot.slane %v1369, 2
    %v1372 = vshll.u32 %v1199, 16
    %v1374 = vrot.slane %v1372, 3
    %v1375 = vor.u32 %v1371, %v1374
    %v1376 = vrot.slane %v831, 2
    %v1377 = vrot.slane %v834, 3
    %v1378 = vor.u32 %v1376, %v1377
    %v1379 = vsel %vm1367, %v1375, %v1378
    %v1380 = vrot.slane %v840, 2
    %v1381 = vrot.slane %v843, 3
    %v1382 = vor.u32 %v1380, %v1381
    %v1383 = vsel %vm1367, %v1378, %v1382
    %v1384 = vrot.slane %v849, 2
    %v1385 = vrot.slane %v852, 3
    %v1386 = vor.u32 %v1384, %v1385
    %v1387 = vsel %vm1367, %v1382, %v1386
    %v1388 = vrot.slane %v858, 2
    %v1389 = vrot.slane %v861, 3
    %v1390 = vor.u32 %v1388, %v1389
    %v1391 = vsel %vm1367, %v1386, %v1390
    %v1392 = vrot.slane %v867, 2
    %v1393 = vrot.slane %v870, 3
    %v1394 = vor.u32 %v1392, %v1393
    %v1395 = vsel %vm1367, %v1390, %v1394
    %v1396 = vrot.slane %v876, 2
    %v1397 = vrot.slane %v879, 3
    %v1398 = vor.u32 %v1396, %v1397
    %v1399 = vsel %vm1367, %v1394, %v1398
    %v1401 = vshrl.u32 %v1363, 16
    %v1403 = vrot.slane %v1401, 2
    %v1404 = vshll.u32 %v1363, 16
    %v1406 = vrot.slane %v1404, 3
    %v1407 = vor.u32 %v1403, %v1406
    %v1408 = vsel %vm1367, %v1398, %v1407
    %v1411 = vunpack.c.l.b16 %v1365
    %v1412 = vunpack.c.l.b16 %v1366
    %v1413 = vpack.c.b16 %v1412, %v1411
    %v1416 = vsel %vm110, %v1379, 0
    %v1419 = vsel %vm110, %v1383, 0
    %v1422 = vsel %vm110, %v1387, 0
    %v1425 = vsel %vm110, %v1391, 0
    %v1428 = vsel %vm110, %v1395, 0
    %v1431 = vsel %vm110, %v1399, 0
    %v1434 = vsel %vm110, %v1408, 0
    %v1437 = vsel %vm110, %v1407, 0
    %1439 = vmatprep.subr.bf16.mxu0 0
    %1440 = vmatpush1.bf16.msra.mxu0 %v1413
    %1441 = vmatprep.subr.bf16.mxu0 0
    %1442 = vmatpush1.bf16.msra.mxu0 0
    %1443 = vmatprep.subr.bf16.mxu0 0
    %1444 = vmatpush1.bf16.msra.mxu0 0
    %1445 = vmatprep.subr.bf16.mxu0 0
    %1446 = vmatpush1.bf16.msra.mxu0 0
    %1447 = vmatprep.subr.bf16.mxu0 0
    %1448 = vmatpush1.bf16.msra.mxu0 0
    %1449 = vmatprep.subr.bf16.mxu0 0
    %1450 = vmatpush1.bf16.msra.mxu0 0
    %1451 = vmatprep.subr.bf16.mxu0 0
    %1452 = vmatpush1.bf16.msra.mxu0 0
    %1453 = vmatprep.subr.bf16.mxu0 0
    %1454 = vmatpush1.bf16.msra.mxu0 0
    %1455 = vmatprep.subr.bf16.mxu0 0
    %1456 = vmatpush1.bf16.msra.mxu0 0
    %1457 = vmatprep.subr.bf16.mxu0 0
    %1458 = vmatpush1.bf16.msra.mxu0 0
    %1459 = vmatprep.subr.bf16.mxu0 0
    %1460 = vmatpush1.bf16.msra.mxu0 0
    %1461 = vmatprep.subr.bf16.mxu0 0
    %1462 = vmatpush1.bf16.msra.mxu0 0
    %1463 = vmatprep.subr.bf16.mxu0 0
    %1464 = vmatpush1.bf16.msra.mxu0 0
    %1465 = vmatprep.subr.bf16.mxu0 0
    %1466 = vmatpush1.bf16.msra.mxu0 0
    %1467 = vmatprep.subr.bf16.mxu0 0
    %1468 = vmatpush1.bf16.msra.mxu0 0
    %1469 = vmatprep.subr.bf16.mxu0 0
    %1470 = vmatpush1.bf16.msra.mxu0 0
    %1471 = vmatprep.mubr.bf16.mxu0 0
    %1472 = vmatmul.mubr.bf16.gmra.mrb[0].mxu0 %v1416
    %v1473 = vpop.f32.mrb[0].mxu0
    %v1474 = vadd.f32 0.0, %v1473
    %v1475 = vpop.f32.mrb[0].mxu0
    %v1476 = vpop.f32.mrb[0].mxu0
    %v1477 = vadd.f32 0.0, %v1476
    %v1478 = vpop.f32.mrb[0].mxu0
    %1479 = vmatprep.mubr.bf16.mxu0 0
    %1480 = vmatmul.mubr.bf16.gmra.mrb[0].mxu0 %v1419
    %v1481 = vpop.f32.mrb[0].mxu0
    %v1482 = vadd.f32 0.0, %v1481
    %v1483 = vpop.f32.mrb[0].mxu0
    %v1484 = vpop.f32.mrb[0].mxu0
    %v1485 = vadd.f32 0.0, %v1484
    %v1486 = vpop.f32.mrb[0].mxu0
    %1487 = vmatprep.mubr.bf16.mxu0 0
    %1488 = vmatmul.mubr.bf16.gmra.mrb[0].mxu0 %v1422
    %v1489 = vpop.f32.mrb[0].mxu0
    %v1490 = vadd.f32 0.0, %v1489
    %v1491 = vpop.f32.mrb[0].mxu0
    %v1492 = vpop.f32.mrb[0].mxu0
    %v1493 = vadd.f32 0.0, %v1492
    %v1494 = vpop.f32.mrb[0].mxu0
    %1495 = vmatprep.mubr.bf16.mxu0 0
    %1496 = vmatmul.mubr.bf16.gmra.mrb[0].mxu0 %v1425
    %v1497 = vpop.f32.mrb[0].mxu0
    %v1498 = vadd.f32 0.0, %v1497
    %v1499 = vpop.f32.mrb[0].mxu0
    %v1500 = vpop.f32.mrb[0].mxu0
    %v1501 = vadd.f32 0.0, %v1500
    %v1502 = vpop.f32.mrb[0].mxu0
    %1503 = vmatprep.mubr.bf16.mxu0 0
    %1504 = vmatmul.mubr.bf16.gmra.mrb[0].mxu0 %v1428
    %v1505 = vpop.f32.mrb[0].mxu0
    %v1506 = vadd.f32 0.0, %v1505
    %v1507 = vpop.f32.mrb[0].mxu0
    %v1508 = vpop.f32.mrb[0].mxu0
    %v1509 = vadd.f32 0.0, %v1508
    %v1510 = vpop.f32.mrb[0].mxu0
    %1511 = vmatprep.mubr.bf16.mxu0 0
    %1512 = vmatmul.mubr.bf16.gmra.mrb[0].mxu0 %v1431
    %v1513 = vpop.f32.mrb[0].mxu0
    %v1514 = vadd.f32 0.0, %v1513
    %v1515 = vpop.f32.mrb[0].mxu0
    %v1516 = vpop.f32.mrb[0].mxu0
    %v1517 = vadd.f32 0.0, %v1516
    %v1518 = vpop.f32.mrb[0].mxu0
    %1519 = vmatprep.mubr.bf16.mxu0 0
    %1520 = vmatmul.mubr.bf16.gmra.mrb[0].mxu0 %v1434
    %v1521 = vpop.f32.mrb[0].mxu0
    %v1522 = vadd.f32 0.0, %v1521
    %v1523 = vpop.f32.mrb[0].mxu0
    %v1524 = vpop.f32.mrb[0].mxu0
    %v1525 = vadd.f32 0.0, %v1524
    %v1526 = vpop.f32.mrb[0].mxu0
    %1527 = vmatprep.mubr.bf16.mxu0 0
    %1528 = vmatmul.mubr.bf16.gmra.mrb[0].mxu0 %v1437
    %v1529 = vpop.f32.mrb[0].mxu0
    %v1530 = vadd.f32 0.0, %v1529
    %v1531 = vpop.f32.mrb[0].mxu0
    %v1532 = vpop.f32.mrb[0].mxu0
    %v1533 = vpop.f32.mrb[0].mxu0
    %1534 = vdwg.mxu0
    %v1535 = vadd.f32 %v1348, %v1474
    %v1536 = vadd.f32 %v1349, %v1477
    %v1537 = vadd.f32 %v1350, %v1482
    %v1538 = vadd.f32 %v1351, %v1485
    %v1539 = vadd.f32 %v1352, %v1490
    %v1540 = vadd.f32 %v1353, %v1493
    %v1541 = vadd.f32 %v1354, %v1498
    %v1542 = vadd.f32 %v1355, %v1501
    %v1543 = vadd.f32 %v1356, %v1506
    %v1544 = vadd.f32 %v1357, %v1509
    %v1545 = vadd.f32 %v1358, %v1514
    %v1546 = vadd.f32 %v1359, %v1517
    %v1547 = vadd.f32 %v1360, %v1522
    %v1548 = vadd.f32 %v1361, %v1525
    %v1549 = vadd.f32 %v1362, %v1530
    %v1550 = vld [vmem:[#allocation2 + $0x8] sm:$0xf8]
    %s1551 = scalar_lea.vmem %s2, 64
    %v1552 = vld [vmem:[%s1551] sm:$0xf]
    %v1553 = vld [vmem:[%s1551 + $0x4] sm:$0xf]
    %vm1556 = vcmask 1044480
    %v1557 = vrot.slane %v1550, 3
    %v1558 = vrot.slane %v630, 3
    %v1559 = vsel %vm1556, %v1557, %v1558
    %v1560 = vrot.slane %v631, 3
    %v1561 = vsel %vm1556, %v1558, %v1560
    %v1562 = vrot.slane %v632, 3
    %v1563 = vsel %vm1556, %v1560, %v1562
    %v1564 = vrot.slane %v633, 3
    %v1565 = vsel %vm1556, %v1562, %v1564
    %v1566 = vrot.slane %v634, 3
    %v1567 = vsel %vm1556, %v1564, %v1566
    %v1568 = vrot.slane %v635, 3
    %v1569 = vsel %vm1556, %v1566, %v1568
    %v1570 = vrot.slane %v1363, 3
    %v1571 = vsel %vm1556, %v1568, %v1570
    %v1574 = vunpack.c.l.b16 %v1552
    %v1575 = vunpack.c.l.b16 %v1553
    %v1576 = vpack.c.b16 %v1575, %v1574
    %v1579 = vsel %vm110, %v1559, 0
    %v1582 = vsel %vm110, %v1561, 0
    %v1585 = vsel %vm110, %v1563, 0
    %v1588 = vsel %vm110, %v1565, 0
    %v1591 = vsel %vm110, %v1567, 0
    %v1594 = vsel %vm110, %v1569, 0
    %v1597 = vsel %vm110, %v1571, 0
    %v1600 = vsel %vm110, %v1570, 0
    %1602 = vmatprep.subr.bf16.mxu0 0
    %1603 = vmatpush1.bf16.msra.mxu0 %v1576
    %1604 = vmatprep.subr.bf16.mxu0 0
    %1605 = vmatpush1.bf16.msra.mxu0 0
    %1606 = vmatprep.subr.bf16.mxu0 0
    %1607 = vmatpush1.bf16.msra.mxu0 0
    %1608 = vmatprep.subr.bf16.mxu0 0
    %1609 = vmatpush1.bf16.msra.mxu0 0
    %1610 = vmatprep.subr.bf16.mxu0 0
    %1611 = vmatpush1.bf16.msra.mxu0 0
    %1612 = vmatprep.subr.bf16.mxu0 0
    %1613 = vmatpush1.bf16.msra.mxu0 0
    %1614 = vmatprep.subr.bf16.mxu0 0
    %1615 = vmatpush1.bf16.msra.mxu0 0
    %1616 = vmatprep.subr.bf16.mxu0 0
    %1617 = vmatpush1.bf16.msra.mxu0 0
    %1618 = vmatprep.subr.bf16.mxu0 0
    %1619 = vmatpush1.bf16.msra.mxu0 0
    %1620 = vmatprep.subr.bf16.mxu0 0
    %1621 = vmatpush1.bf16.msra.mxu0 0
    %1622 = vmatprep.subr.bf16.mxu0 0
    %1623 = vmatpush1.bf16.msra.mxu0 0
    %1624 = vmatprep.subr.bf16.mxu0 0
    %1625 = vmatpush1.bf16.msra.mxu0 0
    %1626 = vmatprep.subr.bf16.mxu0 0
    %1627 = vmatpush1.bf16.msra.mxu0 0
    %1628 = vmatprep.subr.bf16.mxu0 0
    %1629 = vmatpush1.bf16.msra.mxu0 0
    %1630 = vmatprep.subr.bf16.mxu0 0
    %1631 = vmatpush1.bf16.msra.mxu0 0
    %1632 = vmatprep.subr.bf16.mxu0 0
    %1633 = vmatpush1.bf16.msra.mxu0 0
    %1634 = vmatprep.mubr.bf16.mxu0 0
    %1635 = vmatmul.mubr.bf16.gmra.mrb[0].mxu0 %v1579
    %v1636 = vpop.f32.mrb[0].mxu0
    %v1637 = vadd.f32 0.0, %v1636
    %v1638 = vpop.f32.mrb[0].mxu0
    %v1639 = vpop.f32.mrb[0].mxu0
    %v1640 = vadd.f32 0.0, %v1639
    %v1641 = vpop.f32.mrb[0].mxu0
    %1642 = vmatprep.mubr.bf16.mxu0 0
    %1643 = vmatmul.mubr.bf16.gmra.mrb[0].mxu0 %v1582
    %v1644 = vpop.f32.mrb[0].mxu0
    %v1645 = vadd.f32 0.0, %v1644
    %v1646 = vpop.f32.mrb[0].mxu0
    %v1647 = vpop.f32.mrb[0].mxu0
    %v1648 = vadd.f32 0.0, %v1647
    %v1649 = vpop.f32.mrb[0].mxu0
    %1650 = vmatprep.mubr.bf16.mxu0 0
    %1651 = vmatmul.mubr.bf16.gmra.mrb[0].mxu0 %v1585
    %v1652 = vpop.f32.mrb[0].mxu0
    %v1653 = vadd.f32 0.0, %v1652
    %v1654 = vpop.f32.mrb[0].mxu0
    %v1655 = vpop.f32.mrb[0].mxu0
    %v1656 = vadd.f32 0.0, %v1655
    %v1657 = vpop.f32.mrb[0].mxu0
    %1658 = vmatprep.mubr.bf16.mxu0 0
    %1659 = vmatmul.mubr.bf16.gmra.mrb[0].mxu0 %v1588
    %v1660 = vpop.f32.mrb[0].mxu0
    %v1661 = vadd.f32 0.0, %v1660
    %v1662 = vpop.f32.mrb[0].mxu0
    %v1663 = vpop.f32.mrb[0].mxu0
    %v1664 = vadd.f32 0.0, %v1663
    %v1665 = vpop.f32.mrb[0].mxu0
    %1666 = vmatprep.mubr.bf16.mxu0 0
    %1667 = vmatmul.mubr.bf16.gmra.mrb[0].mxu0 %v1591
    %v1668 = vpop.f32.mrb[0].mxu0
    %v1669 = vadd.f32 0.0, %v1668
    %v1670 = vpop.f32.mrb[0].mxu0
    %v1671 = vpop.f32.mrb[0].mxu0
    %v1672 = vadd.f32 0.0, %v1671
    %v1673 = vpop.f32.mrb[0].mxu0
    %1674 = vmatprep.mubr.bf16.mxu0 0
    %1675 = vmatmul.mubr.bf16.gmra.mrb[0].mxu0 %v1594
    %v1676 = vpop.f32.mrb[0].mxu0
    %v1677 = vadd.f32 0.0, %v1676
    %v1678 = vpop.f32.mrb[0].mxu0
    %v1679 = vpop.f32.mrb[0].mxu0
    %v1680 = vadd.f32 0.0, %v1679
    %v1681 = vpop.f32.mrb[0].mxu0
    %1682 = vmatprep.mubr.bf16.mxu0 0
    %1683 = vmatmul.mubr.bf16.gmra.mrb[0].mxu0 %v1597
    %v1684 = vpop.f32.mrb[0].mxu0
    %v1685 = vadd.f32 0.0, %v1684
    %v1686 = vpop.f32.mrb[0].mxu0
    %v1687 = vpop.f32.mrb[0].mxu0
    %v1688 = vadd.f32 0.0, %v1687
    %v1689 = vpop.f32.mrb[0].mxu0
    %1690 = vmatprep.mubr.bf16.mxu0 0
    %1691 = vmatmul.mubr.bf16.gmra.mrb[0].mxu0 %v1600
    %v1692 = vpop.f32.mrb[0].mxu0
    %v1693 = vadd.f32 0.0, %v1692
    %v1694 = vpop.f32.mrb[0].mxu0
    %v1695 = vpop.f32.mrb[0].mxu0
    %v1696 = vpop.f32.mrb[0].mxu0
    %1697 = vdwg.mxu0
    %v1698 = vadd.f32 %v1535, %v1637
    %v1699 = vadd.f32 %v1536, %v1640
    %v1700 = vadd.f32 %v1537, %v1645
    %v1701 = vadd.f32 %v1538, %v1648
    %v1702 = vadd.f32 %v1539, %v1653
    %v1703 = vadd.f32 %v1540, %v1656
    %v1704 = vadd.f32 %v1541, %v1661
    %v1705 = vadd.f32 %v1542, %v1664
    %v1706 = vadd.f32 %v1543, %v1669
    %v1707 = vadd.f32 %v1544, %v1672
    %v1708 = vadd.f32 %v1545, %v1677
    %v1709 = vadd.f32 %v1546, %v1680
    %v1710 = vadd.f32 %v1547, %v1685
    %v1711 = vadd.f32 %v1548, %v1688
    %v1712 = vadd.f32 %v1549, %v1693
    %v1713 = vld [vmem:[%s3] sm:$0x1]
    %v1714 = vld [vmem:[%s4] sm:$0x1]
    %v1716 = vlaneseq
    %v1717 = vshrl.u32 %v1716, 7
    %v1718 = vsub.s32 0, %v1717
    %v1719 = vrot.slane %v1713, %v1718
    %v1721 = vmul.f32 %v1698, %v1719
    %v1722 = vmul.f32 %v1699, %v1719
    %v1723 = vmul.f32 %v1700, %v1719
    %v1724 = vmul.f32 %v1701, %v1719
    %v1725 = vmul.f32 %v1702, %v1719
    %v1726 = vmul.f32 %v1703, %v1719
    %v1727 = vmul.f32 %v1704, %v1719
    %v1728 = vmul.f32 %v1705, %v1719
    %v1729 = vmul.f32 %v1706, %v1719
    %v1730 = vmul.f32 %v1707, %v1719
    %v1731 = vmul.f32 %v1708, %v1719
    %v1732 = vmul.f32 %v1709, %v1719
    %v1733 = vmul.f32 %v1710, %v1719
    %v1734 = vmul.f32 %v1711, %v1719
    %v1735 = vmul.f32 %v1712, %v1719
    %v1737 = vlaneseq
    %v1738 = vshrl.u32 %v1737, 7
    %v1739 = vsub.s32 0, %v1738
    %v1740 = vrot.slane %v1714, %v1739
    %v1742 = vadd.f32 %v1721, %v1740
    %v1743 = vadd.f32 %v1722, %v1740
    %v1744 = vadd.f32 %v1723, %v1740
    %v1745 = vadd.f32 %v1724, %v1740
    %v1746 = vadd.f32 %v1725, %v1740
    %v1747 = vadd.f32 %v1726, %v1740
    %v1748 = vadd.f32 %v1727, %v1740
    %v1749 = vadd.f32 %v1728, %v1740
    %v1750 = vadd.f32 %v1729, %v1740
    %v1751 = vadd.f32 %v1730, %v1740
    %v1752 = vadd.f32 %v1731, %v1740
    %v1753 = vadd.f32 %v1732, %v1740
    %v1754 = vadd.f32 %v1733, %v1740
    %v1755 = vadd.f32 %v1734, %v1740
    %v1756 = vadd.f32 %v1735, %v1740
    %v1757 = vpack.c.bf16 %v1743, %v1742
    %v1758 = vpack.c.bf16 %v1745, %v1744
    %v1759 = vpack.c.bf16 %v1747, %v1746
    %v1760 = vpack.c.bf16 %v1749, %v1748
    %v1761 = vpack.c.bf16 %v1751, %v1750
    %v1762 = vpack.c.bf16 %v1753, %v1752
    %v1763 = vpack.c.bf16 %v1755, %v1754
    %v1764 = vpack.c.bf16 %v1756, %v1756
    %v1773 = vunpack.c.l.b16 %v1757
    %v1774 = vunpack.c.h.b16 %v1757
    %v1775 = vunpack.c.l.b16 %v1758
    %v1776 = vunpack.c.h.b16 %v1758
    %v1777 = vunpack.c.l.b16 %v1759
    %v1778 = vunpack.c.h.b16 %v1759
    %v1779 = vunpack.c.l.b16 %v1760
    %v1780 = vunpack.c.h.b16 %v1760
    %v1781 = vunpack.c.l.b16 %v1761
    %v1782 = vunpack.c.h.b16 %v1761
    %v1783 = vunpack.c.l.b16 %v1762
    %v1784 = vunpack.c.h.b16 %v1762
    %v1785 = vunpack.c.l.b16 %v1763
    %v1786 = vunpack.c.h.b16 %v1763
    %v1787 = vunpack.c.l.b16 %v1764
    %v1788 = vpack.c.b16 %v1773, %v1773
    %v1789 = vpack.c.b16 %v1774, %v1774
    %v1790 = vpack.c.b16 %v1775, %v1775
    %v1791 = vpack.c.b16 %v1776, %v1776
    %v1792 = vpack.c.b16 %v1777, %v1777
    %v1793 = vpack.c.b16 %v1778, %v1778
    %v1794 = vpack.c.b16 %v1779, %v1779
    %v1795 = vpack.c.b16 %v1780, %v1780
    %v1796 = vpack.c.b16 %v1781, %v1781
    %v1797 = vpack.c.b16 %v1782, %v1782
    %v1798 = vpack.c.b16 %v1783, %v1783
    %v1799 = vpack.c.b16 %v1784, %v1784
    %v1800 = vpack.c.b16 %v1785, %v1785
    %v1801 = vpack.c.b16 %v1786, %v1786
    %v1802 = vpack.c.b16 %v1787, %v1787
    %1818 = vst [vmem:[#allocation3] sm:$0xf] %v1788
    %1819 = vst [vmem:[#allocation3 + $0x4] sm:$0xf] %v1789
    %1820 = vst [vmem:[#allocation3 + $0x8] sm:$0xf] %v1790
    %1821 = vst [vmem:[#allocation3 + $0xc] sm:$0xf] %v1791
    %1822 = vst [vmem:[#allocation3 + $0x10] sm:$0xf] %v1792
    %1823 = vst [vmem:[#allocation3 + $0x14] sm:$0xf] %v1793
    %1824 = vst [vmem:[#allocation3 + $0x18] sm:$0xf] %v1794
    %1825 = vst [vmem:[#allocation3 + $0x1c] sm:$0xf] %v1795
    %1826 = vst [vmem:[#allocation3 + $0x20] sm:$0xf] %v1796
    %1827 = vst [vmem:[#allocation3 + $0x24] sm:$0xf] %v1797
    %1828 = vst [vmem:[#allocation3 + $0x28] sm:$0xf] %v1798
    %1829 = vst [vmem:[#allocation3 + $0x2c] sm:$0xf] %v1799
    %1830 = vst [vmem:[#allocation3 + $0x30] sm:$0xf] %v1800
    %1831 = vst [vmem:[#allocation3 + $0x34] sm:$0xf] %v1801
    %1832 = vst [vmem:[#allocation3 + $0x38] sm:$0xf] %v1802
    // Predicated region
    $region22: #{tpu_custom_call.1} parent=1 // pred_check
      _
    $region23: #{tpu_custom_call.1} parent=1 // pred_check_branch
      %1834 = sbr.rel (0) target = $region25
    $region24: #{tpu_custom_call.1} parent=1 // pred_region
      %s1836 = ssub.s32 960, 960
      %1837 = vsyncadd [#allocation4], %s1836
      %s1838 = sshll.u32 [#allocation3], 4
      %s1839 = int_to_ptr.vmem [resolvable:$true] %s1838
      %1844 = dma.vmem_to_hbm [thread:$0]  %s1839, 960, %s5, [#allocation4], 64, 64, 4
    $region25: #{tpu_custom_call.1} parent=1 // pred_fallthru
      _
    // Predicated region
    $region26: #{tpu_custom_call.1} parent=1 // pred_check
      _
    $region27: #{tpu_custom_call.1} parent=1 // pred_check_branch
      %1846 = sbr.rel (0) target = $region29
    $region28: #{tpu_custom_call.1} parent=1 // pred_region
      %1847 = dma.done [#allocation4], 960
    $region29: #{tpu_custom_call.1} parent=1 // pred_fallthru
      _
    %1848 = vsyncpa [#allocation4], 1

</llo_original>
